<compile_context>
chip_gen: v7x
topology: tpu7x:2x2x1
jax: 0.10.0
libtpu: 0.0.40
codegen_flags: <defaults>
</compile_context>

<pallas_src>
import jax
import jax.numpy as jnp
from jax.experimental import pallas as pl
from jax.experimental.pallas import tpu as pltpu


def _round_up(x, m):
    return (x + m - 1) // m * m


# --------------------------------------------------------------------------
# Fused kernel: GCNConv + ReLU + CustomGRU + fc1/ReLU + fc2 for one node tile.
# --------------------------------------------------------------------------
def dyigcn_kernel(a_ref, x_ref, zt_ref,
                  wc_ref, bc_ref, wgx_ref, wgh_ref, bg_ref,
                  w1_ref, b1_ref, w2_ref, b2_ref,
                  zbar_ref, out_ref):
    hp = zt_ref.shape[1]                      # padded GRU width (multiple of 128)
    f32 = jnp.float32

    # ---- GCNConv: (Â @ X) @ Wc + bc, then ReLU (dropout = identity, eval) ----
    ax = jnp.dot(a_ref[...], x_ref[...], preferred_element_type=f32)
    x_emb = jnp.dot(ax, wc_ref[...], preferred_element_type=f32) + bc_ref[...]
    x_emb1 = jnp.maximum(x_emb, 0.0)

    # ---- CustomGRU: one gate slab  g = x_emb1 @ Wgx + Zt @ Wgh + bg ----------
    # Column blocks of g: [ r | z | n-input-side | n-hidden-side ], biases
    # (incl. the extra nn.Parameter biases) already folded into bg.
    zt = zt_ref[...]
    g = (jnp.dot(x_emb1, wgx_ref[...], preferred_element_type=f32)
         + jnp.dot(zt, wgh_ref[...], preferred_element_type=f32)
         + bg_ref[...])

    r_t = jax.nn.sigmoid(g[:, 0 * hp:1 * hp])
    z_t = jax.nn.sigmoid(g[:, 1 * hp:2 * hp])
    n_t = jnp.tanh(g[:, 2 * hp:3 * hp] + r_t * g[:, 3 * hp:4 * hp])
    zbar = (1.0 - z_t) * n_t + z_t * zt
    zbar_ref[...] = zbar.astype(zbar_ref.dtype)

    # ---- Head: ReLU(fc1(zbar)) -> fc2 ---------------------------------------
    h1 = jnp.maximum(
        jnp.dot(zbar, w1_ref[...], preferred_element_type=f32) + b1_ref[...], 0.0)
    out_ref[...] = (jnp.dot(h1, w2_ref[...], preferred_element_type=f32)
                    + b2_ref[...]).astype(out_ref.dtype)


# --------------------------------------------------------------------------
# Wrapper-side preprocessing.
# --------------------------------------------------------------------------
def gcn_norm_adj(edge_index, num_nodes):
    """Dense symmetric-normalized adjacency with self loops: D^-1/2 (A+I) D^-1/2."""
    f32 = jnp.float32
    src, dst = edge_index[0], edge_index[1]
    a = jnp.zeros((num_nodes, num_nodes), f32).at[dst, src].add(1.0)
    a = a + jnp.eye(num_nodes, dtype=f32)
    deg_inv_sqrt = 1.0 / jnp.sqrt(a.sum(axis=1))
    return a * deg_inv_sqrt[:, None] * deg_inv_sqrt[None, :]


def _pack_weights(params, in_size, gru, hid, out_size, FP, HP, H1P, OP):
    """Pad / transpose all weights into lane-dense matmul operands (f32)."""
    f32 = jnp.float32

    wc = jnp.zeros((FP, HP), f32).at[:in_size, :gru].set(params["conv_w"].T.astype(f32))
    bc = jnp.zeros((1, HP), f32).at[0, :gru].set(params["conv_b"].astype(f32))

    def blk(w):                                  # (out, in) -> padded (HP, HP) block
        b = jnp.zeros((HP, HP), f32)
        return b.at[:w.shape[1], :gru].set(w.T.astype(f32))

    wgx = jnp.concatenate([blk(params["W_ir_w"]), blk(params["W_iz_w"]),
                           blk(params["W_in_w"]), jnp.zeros((HP, HP), f32)], axis=1)
    wgh = jnp.concatenate([blk(params["W_hr_w"]), blk(params["W_hz_w"]),
                           jnp.zeros((HP, HP), f32), blk(params["W_hn_w"])], axis=1)

    def bvec(b):
        return jnp.zeros((HP,), f32).at[:gru].set(b.astype(f32))

    b_r = bvec(params["W_ir_b"] + params["b_ir"] + params["W_hr_b"] + params["b_hr"])
    b_z = bvec(params["W_iz_b"] + params["b_iz"] + params["W_hz_b"] + params["b_hz"])
    b_in = bvec(params["W_in_b"] + params["b_in"])
    b_hn = bvec(params["W_hn_b"] + params["b_hn"])
    bg = jnp.concatenate([b_r, b_z, b_in, b_hn])[None, :]

    w1 = jnp.zeros((HP, H1P), f32).at[:gru, :hid].set(params["fc1_w"].T.astype(f32))
    b1 = jnp.zeros((1, H1P), f32).at[0, :hid].set(params["fc1_b"].astype(f32))
    w2 = jnp.zeros((H1P, OP), f32).at[:hid, :out_size].set(params["fc2_w"].T.astype(f32))
    b2 = jnp.zeros((1, OP), f32).at[0, :out_size].set(params["fc2_b"].astype(f32))
    return wc, bc, wgx, wgh, bg, w1, b1, w2, b2


def dyigcn_forward(x0, edge_index, Zt, params, *, node_tile=256):
    """DyIGCN.forward(data0, Zt, first=False) in eval mode -> (out_final, zbar)."""
    f32 = jnp.float32
    N, in_size = x0.shape
    gru = Zt.shape[1]                       # hid_size0 * 2
    hid = params["fc1_w"].shape[0]
    out_size = params["fc2_w"].shape[0]

    FP = _round_up(in_size, 128)            # node-feature width
    HP = _round_up(gru, 128)                # conv-out / GRU width
    H1P = _round_up(hid, 128)               # fc1 width
    OP = _round_up(out_size, 128)           # fc2 width
    NP = _round_up(N, 128)                  # adjacency columns / feature rows

    bm = min(_round_up(N, 8), node_tile)    # node (row) tile, multiple of 8
    BMP = _round_up(N, bm)                  # padded node count

    a_hat = gcn_norm_adj(edge_index, N)
    a_p = jnp.zeros((BMP, NP), f32).at[:N, :N].set(a_hat)
    x_p = jnp.zeros((NP, FP), f32).at[:N, :in_size].set(x0.astype(f32))
    zt_p = jnp.zeros((BMP, HP), f32).at[:N, :gru].set(Zt.astype(f32))

    wc, bc, wgx, wgh, bg, w1, b1, w2, b2 = _pack_weights(
        params, in_size, gru, hid, out_size, FP, HP, H1P, OP)

    zbar_p, out_p = pl.pallas_call(
        dyigcn_kernel,
        out_shape=(jax.ShapeDtypeStruct((BMP, HP), f32),
                   jax.ShapeDtypeStruct((BMP, OP), f32)),
        grid_spec=pltpu.PrefetchScalarGridSpec(
            num_scalar_prefetch=0,
            grid=(BMP // bm,),
            in_specs=[
                pl.BlockSpec((bm, NP), lambda i: (i, 0)),       # Â row tile
                pl.BlockSpec((NP, FP), lambda i: (0, 0)),       # node features (resident)
                pl.BlockSpec((bm, HP), lambda i: (i, 0)),       # Zt row tile
                pl.BlockSpec((FP, HP), lambda i: (0, 0)),       # conv weight
                pl.BlockSpec((1, HP), lambda i: (0, 0)),        # conv bias
                pl.BlockSpec((HP, 4 * HP), lambda i: (0, 0)),   # GRU input-side weights
                pl.BlockSpec((HP, 4 * HP), lambda i: (0, 0)),   # GRU hidden-side weights
                pl.BlockSpec((1, 4 * HP), lambda i: (0, 0)),    # GRU folded biases
                pl.BlockSpec((HP, H1P), lambda i: (0, 0)),      # fc1 weight
                pl.BlockSpec((1, H1P), lambda i: (0, 0)),       # fc1 bias
                pl.BlockSpec((H1P, OP), lambda i: (0, 0)),      # fc2 weight
                pl.BlockSpec((1, OP), lambda i: (0, 0)),        # fc2 bias
            ],
            out_specs=[
                pl.BlockSpec((bm, HP), lambda i: (i, 0)),       # zbar
                pl.BlockSpec((bm, OP), lambda i: (i, 0)),       # out_final
            ],
        ),
        compiler_params=pltpu.CompilerParams(
            dimension_semantics=("parallel",)),                 # node tiles -> both TCs on v7x
    )(a_p, x_p, zt_p, wc, bc, wgx, wgh, bg, w1, b1, w2, b2)

    return (out_p[:N, :out_size].astype(x0.dtype),
            zbar_p[:N, :gru].astype(x0.dtype))


# --------------------------------------------------------------------------
# Deterministic synthetic params + pure-JAX reference (mirrors the PyTorch
# module's forward math exactly, using the same dense normalized adjacency).
# --------------------------------------------------------------------------
def init_params(key, in_size, hid_size, out_size):
    gru = hid_size * 2
    keys = iter(jax.random.split(key, 32))

    def nrm(shape, scale=0.1):
        return jax.random.normal(next(keys), shape, jnp.float32) * scale

    p = {"conv_w": nrm((gru, in_size)), "conv_b": nrm((gru,))}
    for n in ["W_ir", "W_iz", "W_in", "W_hr", "W_hz", "W_hn"]:
        p[f"{n}_w"] = nrm((gru, gru))
        p[f"{n}_b"] = nrm((gru,))
    # Extra nn.Parameter biases (zeros in __init__; non-zero here to exercise
    # the bias-folding path).
    for n in ["b_ir", "b_hr", "b_iz", "b_hz", "b_in", "b_hn"]:
        p[n] = nrm((gru,), 0.05)
    p["fc1_w"] = nrm((hid_size, gru))
    p["fc1_b"] = nrm((hid_size,))
    p["fc2_w"] = nrm((out_size, hid_size))
    p["fc2_b"] = nrm((out_size,))
    return p


def dyigcn_reference(a_hat, x0, Zt, p):
    def lin(x, w, b):
        return x @ w.T + b

    x_emb1 = jax.nn.relu(a_hat @ x0 @ p["conv_w"].T + p["conv_b"])
    r = jax.nn.sigmoid(lin(x_emb1, p["W_ir_w"], p["W_ir_b"]) + p["b_ir"]
                       + lin(Zt, p["W_hr_w"], p["W_hr_b"]) + p["b_hr"])
    z = jax.nn.sigmoid(lin(x_emb1, p["W_iz_w"], p["W_iz_b"]) + p["b_iz"]
                       + lin(Zt, p["W_hz_w"], p["W_hz_b"]) + p["b_hz"])
    n = jnp.tanh(lin(x_emb1, p["W_in_w"], p["W_in_b"]) + p["b_in"]
                 + r * (lin(Zt, p["W_hn_w"], p["W_hn_b"]) + p["b_hn"]))
    zbar = (1.0 - z) * n + z * Zt
    h1 = jax.nn.relu(zbar @ p["fc1_w"].T + p["fc1_b"])
    out = h1 @ p["fc2_w"].T + p["fc2_b"]
    return out, zbar


if __name__ == "__main__":
    # Shapes implied by DyIGCN(in_size0=16, hid_size0=8, out_size=2).
    in_size0, hid_size0, out_size = 16, 8, 2
    gru = hid_size0 * 2
    num_nodes = 64

    key = jax.random.PRNGKey(0)
    k_x, k_z, k_p = jax.random.split(key, 3)
    x0 = jax.random.normal(k_x, (num_nodes, in_size0), jnp.float32)   # data0.x
    Zt = jax.random.normal(k_z, (num_nodes, gru), jnp.float32)        # previous state
    params = init_params(k_p, in_size0, hid_size0, out_size)

    # Deterministic undirected edge set: ring + a few long chords.
    ring_s = jnp.arange(num_nodes)
    ring_d = (ring_s + 1) % num_nodes
    chord_s = jnp.arange(0, num_nodes, 7)
    chord_d = (chord_s + num_nodes // 2) % num_nodes
    src = jnp.concatenate([ring_s, ring_d, chord_s, chord_d])
    dst = jnp.concatenate([ring_d, ring_s, chord_d, chord_s])
    edge_index = jnp.stack([src, dst]).astype(jnp.int32)

    out_final, zbar = dyigcn_forward(x0, edge_index, Zt, params)
    out_final = jax.block_until_ready(out_final)
    zbar = jax.block_until_ready(zbar)

    a_hat = gcn_norm_adj(edge_index, num_nodes)
    ref_out, ref_zbar = dyigcn_reference(a_hat, x0, Zt, params)

    assert out_final.shape == (num_nodes, out_size)
    assert zbar.shape == (num_nodes, gru)
    assert jnp.allclose(zbar, ref_zbar, atol=2e-5, rtol=2e-5), "zbar mismatch"
    assert jnp.allclose(out_final, ref_out, atol=2e-5, rtol=2e-5), "out mismatch"

    print("KERNEL_OK")
</pallas_src>

<mosaic_0001>
module attributes {stable_mosaic.version = 11 : i64} {
  func.func @dyigcn_kernel(%arg0: i32, %arg1: memref<64x128xf32, #tpu.memory_space<vmem>>, %arg2: memref<128x128xf32, #tpu.memory_space<vmem>>, %arg3: memref<64x128xf32, #tpu.memory_space<vmem>>, %arg4: memref<128x128xf32, #tpu.memory_space<vmem>>, %arg5: memref<1x128xf32, #tpu.memory_space<vmem>>, %arg6: memref<128x512xf32, #tpu.memory_space<vmem>>, %arg7: memref<128x512xf32, #tpu.memory_space<vmem>>, %arg8: memref<1x512xf32, #tpu.memory_space<vmem>>, %arg9: memref<128x128xf32, #tpu.memory_space<vmem>>, %arg10: memref<1x128xf32, #tpu.memory_space<vmem>>, %arg11: memref<128x128xf32, #tpu.memory_space<vmem>>, %arg12: memref<1x128xf32, #tpu.memory_space<vmem>>, %arg13: memref<64x128xf32, #tpu.memory_space<vmem>>, %arg14: memref<64x128xf32, #tpu.memory_space<vmem>>) attributes {dimension_semantics = [#tpu.dimension_semantics<parallel>], iteration_bounds = array<i64: 1>, scalar_prefetch = 0 : i64, scratch_operands = 0 : i64, tpu.core_type = #tpu.core_type<tc>, window_params = [{transform_indices = @transform_0, window_bounds = array<i64: 64, 128>}, {pipeline_mode = #tpu.pipeline_mode<synchronous>, transform_indices = @transform_1, window_bounds = array<i64: 128, 128>}, {transform_indices = @transform_2, window_bounds = array<i64: 64, 128>}, {pipeline_mode = #tpu.pipeline_mode<synchronous>, transform_indices = @transform_3, window_bounds = array<i64: 128, 128>}, {pipeline_mode = #tpu.pipeline_mode<synchronous>, transform_indices = @transform_4, window_bounds = array<i64: 1, 128>}, {pipeline_mode = #tpu.pipeline_mode<synchronous>, transform_indices = @transform_5, window_bounds = array<i64: 128, 512>}, {pipeline_mode = #tpu.pipeline_mode<synchronous>, transform_indices = @transform_6, window_bounds = array<i64: 128, 512>}, {pipeline_mode = #tpu.pipeline_mode<synchronous>, transform_indices = @transform_7, window_bounds = array<i64: 1, 512>}, {pipeline_mode = #tpu.pipeline_mode<synchronous>, transform_indices = @transform_8, window_bounds = array<i64: 128, 128>}, {pipeline_mode = #tpu.pipeline_mode<synchronous>, transform_indices = @transform_9, window_bounds = array<i64: 1, 128>}, {pipeline_mode = #tpu.pipeline_mode<synchronous>, transform_indices = @transform_10, window_bounds = array<i64: 128, 128>}, {pipeline_mode = #tpu.pipeline_mode<synchronous>, transform_indices = @transform_11, window_bounds = array<i64: 1, 128>}, {transform_indices = @transform_12, window_bounds = array<i64: 64, 128>}, {transform_indices = @transform_13, window_bounds = array<i64: 64, 128>}]} {
    %c0 = arith.constant 0 : index
    %c0_0 = arith.constant 0 : index
    %0 = vector.load %arg1[%c0, %c0_0] : memref<64x128xf32, #tpu.memory_space<vmem>>, vector<64x128xf32>
    %c0_1 = arith.constant 0 : index
    %c0_2 = arith.constant 0 : index
    %1 = vector.load %arg2[%c0_1, %c0_2] : memref<128x128xf32, #tpu.memory_space<vmem>>, vector<128x128xf32>
    %cst = arith.constant dense<0.000000e+00> : vector<64x128xf32>
    %2 = tpu.matmul %0, %1, %cst {dimension_numbers = #tpu.dot_dimension_numbers<[1], [0], [0], [1], [0, 0, 1, 1], [], []>} : vector<64x128xf32>, vector<128x128xf32>, vector<64x128xf32> -> vector<64x128xf32>
    %c0_3 = arith.constant 0 : index
    %c0_4 = arith.constant 0 : index
    %3 = vector.load %arg4[%c0_3, %c0_4] : memref<128x128xf32, #tpu.memory_space<vmem>>, vector<128x128xf32>
    %cst_5 = arith.constant dense<0.000000e+00> : vector<64x128xf32>
    %4 = tpu.matmul %2, %3, %cst_5 {dimension_numbers = #tpu.dot_dimension_numbers<[1], [0], [0], [1], [0, 0, 1, 1], [], []>} : vector<64x128xf32>, vector<128x128xf32>, vector<64x128xf32> -> vector<64x128xf32>
    %c0_6 = arith.constant 0 : index
    %c0_7 = arith.constant 0 : index
    %5 = vector.load %arg5[%c0_6, %c0_7] : memref<1x128xf32, #tpu.memory_space<vmem>>, vector<1x128xf32>
    %6 = vector.broadcast %5 : vector<1x128xf32> to vector<64x128xf32>
    %7 = arith.addf %4, %6 : vector<64x128xf32>
    %cst_8 = arith.constant 0.000000e+00 : f32
    %8 = vector.broadcast %cst_8 : f32 to vector<64x128xf32>
    %9 = arith.maximumf %7, %8 : vector<64x128xf32>
    %c0_9 = arith.constant 0 : index
    %c0_10 = arith.constant 0 : index
    %10 = vector.load %arg3[%c0_9, %c0_10] : memref<64x128xf32, #tpu.memory_space<vmem>>, vector<64x128xf32>
    %c0_11 = arith.constant 0 : index
    %c0_12 = arith.constant 0 : index
    %11 = vector.load %arg6[%c0_11, %c0_12] : memref<128x512xf32, #tpu.memory_space<vmem>>, vector<128x512xf32>
    %cst_13 = arith.constant dense<0.000000e+00> : vector<64x512xf32>
    %12 = tpu.matmul %9, %11, %cst_13 {dimension_numbers = #tpu.dot_dimension_numbers<[1], [0], [0], [1], [0, 0, 1, 1], [], []>} : vector<64x128xf32>, vector<128x512xf32>, vector<64x512xf32> -> vector<64x512xf32>
    %c0_14 = arith.constant 0 : index
    %c0_15 = arith.constant 0 : index
    %13 = vector.load %arg7[%c0_14, %c0_15] : memref<128x512xf32, #tpu.memory_space<vmem>>, vector<128x512xf32>
    %cst_16 = arith.constant dense<0.000000e+00> : vector<64x512xf32>
    %14 = tpu.matmul %10, %13, %cst_16 {dimension_numbers = #tpu.dot_dimension_numbers<[1], [0], [0], [1], [0, 0, 1, 1], [], []>} : vector<64x128xf32>, vector<128x512xf32>, vector<64x512xf32> -> vector<64x512xf32>
    %15 = arith.addf %12, %14 : vector<64x512xf32>
    %c0_17 = arith.constant 0 : index
    %c0_18 = arith.constant 0 : index
    %16 = vector.load %arg8[%c0_17, %c0_18] : memref<1x512xf32, #tpu.memory_space<vmem>>, vector<1x512xf32>
    %17 = vector.broadcast %16 : vector<1x512xf32> to vector<64x512xf32>
    %18 = arith.addf %15, %17 : vector<64x512xf32>
    %19 = vector.extract_strided_slice %18 {offsets = [0, 0], sizes = [64, 128], strides = [1, 1]} : vector<64x512xf32> to vector<64x128xf32>
    %20 = arith.negf %19 : vector<64x128xf32>
    %21 = math.exp %20 : vector<64x128xf32>
    %cst_19 = arith.constant 1.000000e+00 : f32
    %22 = vector.broadcast %cst_19 : f32 to vector<64x128xf32>
    %23 = arith.addf %22, %21 : vector<64x128xf32>
    %24 = arith.divf %22, %23 : vector<64x128xf32>
    %25 = vector.extract_strided_slice %18 {offsets = [0, 128], sizes = [64, 128], strides = [1, 1]} : vector<64x512xf32> to vector<64x128xf32>
    %26 = arith.negf %25 : vector<64x128xf32>
    %27 = math.exp %26 : vector<64x128xf32>
    %cst_20 = arith.constant 1.000000e+00 : f32
    %28 = vector.broadcast %cst_20 : f32 to vector<64x128xf32>
    %29 = arith.addf %28, %27 : vector<64x128xf32>
    %30 = arith.divf %28, %29 : vector<64x128xf32>
    %31 = vector.extract_strided_slice %18 {offsets = [0, 256], sizes = [64, 128], strides = [1, 1]} : vector<64x512xf32> to vector<64x128xf32>
    %32 = vector.extract_strided_slice %18 {offsets = [0, 384], sizes = [64, 128], strides = [1, 1]} : vector<64x512xf32> to vector<64x128xf32>
    %33 = arith.mulf %24, %32 : vector<64x128xf32>
    %34 = arith.addf %31, %33 : vector<64x128xf32>
    %35 = math.tanh %34 : vector<64x128xf32>
    %cst_21 = arith.constant 1.000000e+00 : f32
    %36 = vector.broadcast %cst_21 : f32 to vector<64x128xf32>
    %37 = arith.subf %36, %30 : vector<64x128xf32>
    %38 = arith.mulf %37, %35 : vector<64x128xf32>
    %39 = arith.mulf %30, %10 : vector<64x128xf32>
    %40 = arith.addf %38, %39 : vector<64x128xf32>
    %c0_22 = arith.constant 0 : index
    %c0_23 = arith.constant 0 : index
    %41 = vector.load %arg13[%c0_22, %c0_23] : memref<64x128xf32, #tpu.memory_space<vmem>>, vector<64x128xf32>
    tpu.vector_store %arg13[%c0_22, %c0_23], %40 {strides = array<i32>} : memref<64x128xf32, #tpu.memory_space<vmem>>, vector<64x128xf32>,
    %c0_24 = arith.constant 0 : index
    %c0_25 = arith.constant 0 : index
    %42 = vector.load %arg9[%c0_24, %c0_25] : memref<128x128xf32, #tpu.memory_space<vmem>>, vector<128x128xf32>
    %cst_26 = arith.constant dense<0.000000e+00> : vector<64x128xf32>
    %43 = tpu.matmul %40, %42, %cst_26 {dimension_numbers = #tpu.dot_dimension_numbers<[1], [0], [0], [1], [0, 0, 1, 1], [], []>} : vector<64x128xf32>, vector<128x128xf32>, vector<64x128xf32> -> vector<64x128xf32>
    %c0_27 = arith.constant 0 : index
    %c0_28 = arith.constant 0 : index
    %44 = vector.load %arg10[%c0_27, %c0_28] : memref<1x128xf32, #tpu.memory_space<vmem>>, vector<1x128xf32>
    %45 = vector.broadcast %44 : vector<1x128xf32> to vector<64x128xf32>
    %46 = arith.addf %43, %45 : vector<64x128xf32>
    %cst_29 = arith.constant 0.000000e+00 : f32
    %47 = vector.broadcast %cst_29 : f32 to vector<64x128xf32>
    %48 = arith.maximumf %46, %47 : vector<64x128xf32>
    %c0_30 = arith.constant 0 : index
    %c0_31 = arith.constant 0 : index
    %49 = vector.load %arg11[%c0_30, %c0_31] : memref<128x128xf32, #tpu.memory_space<vmem>>, vector<128x128xf32>
    %cst_32 = arith.constant dense<0.000000e+00> : vector<64x128xf32>
    %50 = tpu.matmul %48, %49, %cst_32 {dimension_numbers = #tpu.dot_dimension_numbers<[1], [0], [0], [1], [0, 0, 1, 1], [], []>} : vector<64x128xf32>, vector<128x128xf32>, vector<64x128xf32> -> vector<64x128xf32>
    %c0_33 = arith.constant 0 : index
    %c0_34 = arith.constant 0 : index
    %51 = vector.load %arg12[%c0_33, %c0_34] : memref<1x128xf32, #tpu.memory_space<vmem>>, vector<1x128xf32>
    %52 = vector.broadcast %51 : vector<1x128xf32> to vector<64x128xf32>
    %53 = arith.addf %50, %52 : vector<64x128xf32>
    %c0_35 = arith.constant 0 : index
    %c0_36 = arith.constant 0 : index
    %54 = vector.load %arg14[%c0_35, %c0_36] : memref<64x128xf32, #tpu.memory_space<vmem>>, vector<64x128xf32>
    tpu.vector_store %arg14[%c0_35, %c0_36], %53 {strides = array<i32>} : memref<64x128xf32, #tpu.memory_space<vmem>>, vector<64x128xf32>,
    return
  }
  func.func @transform_0(%arg0: i32) -> (i32, i32) {
    %c0_i32 = arith.constant 0 : i32
    %c0_i32_0 = arith.constant 0 : i32
    return %arg0, %c0_i32 : i32, i32
  }
  func.func @transform_1(%arg0: i32) -> (i32, i32) {
    %c0_i32 = arith.constant 0 : i32
    %c0_i32_0 = arith.constant 0 : i32
    %c0_i32_1 = arith.constant 0 : i32
    return %c0_i32, %c0_i32_0 : i32, i32
  }
  func.func @transform_2(%arg0: i32) -> (i32, i32) {
    %c0_i32 = arith.constant 0 : i32
    %c0_i32_0 = arith.constant 0 : i32
    return %arg0, %c0_i32 : i32, i32
  }
  func.func @transform_3(%arg0: i32) -> (i32, i32) {
    %c0_i32 = arith.constant 0 : i32
    %c0_i32_0 = arith.constant 0 : i32
    %c0_i32_1 = arith.constant 0 : i32
    return %c0_i32, %c0_i32_0 : i32, i32
  }
  func.func @transform_4(%arg0: i32) -> (i32, i32) {
    %c0_i32 = arith.constant 0 : i32
    %c0_i32_0 = arith.constant 0 : i32
    %c0_i32_1 = arith.constant 0 : i32
    return %c0_i32, %c0_i32_0 : i32, i32
  }
  func.func @transform_5(%arg0: i32) -> (i32, i32) {
    %c0_i32 = arith.constant 0 : i32
    %c0_i32_0 = arith.constant 0 : i32
    %c0_i32_1 = arith.constant 0 : i32
    return %c0_i32, %c0_i32_0 : i32, i32
  }
  func.func @transform_6(%arg0: i32) -> (i32, i32) {
    %c0_i32 = arith.constant 0 : i32
    %c0_i32_0 = arith.constant 0 : i32
    %c0_i32_1 = arith.constant 0 : i32
    return %c0_i32, %c0_i32_0 : i32, i32
  }
  func.func @transform_7(%arg0: i32) -> (i32, i32) {
    %c0_i32 = arith.constant 0 : i32
    %c0_i32_0 = arith.constant 0 : i32
    %c0_i32_1 = arith.constant 0 : i32
    return %c0_i32, %c0_i32_0 : i32, i32
  }
  func.func @transform_8(%arg0: i32) -> (i32, i32) {
    %c0_i32 = arith.constant 0 : i32
    %c0_i32_0 = arith.constant 0 : i32
    %c0_i32_1 = arith.constant 0 : i32
    return %c0_i32, %c0_i32_0 : i32, i32
  }
  func.func @transform_9(%arg0: i32) -> (i32, i32) {
    %c0_i32 = arith.constant 0 : i32
    %c0_i32_0 = arith.constant 0 : i32
    %c0_i32_1 = arith.constant 0 : i32
    return %c0_i32, %c0_i32_0 : i32, i32
  }
  func.func @transform_10(%arg0: i32) -> (i32, i32) {
    %c0_i32 = arith.constant 0 : i32
    %c0_i32_0 = arith.constant 0 : i32
    %c0_i32_1 = arith.constant 0 : i32
    return %c0_i32, %c0_i32_0 : i32, i32
  }
  func.func @transform_11(%arg0: i32) -> (i32, i32) {
    %c0_i32 = arith.constant 0 : i32
    %c0_i32_0 = arith.constant 0 : i32
    %c0_i32_1 = arith.constant 0 : i32
    return %c0_i32, %c0_i32_0 : i32, i32
  }
  func.func @transform_12(%arg0: i32) -> (i32, i32) {
    %c0_i32 = arith.constant 0 : i32
    %c0_i32_0 = arith.constant 0 : i32
    return %arg0, %c0_i32 : i32, i32
  }
  func.func @transform_13(%arg0: i32) -> (i32, i32) {
    %c0_i32 = arith.constant 0 : i32
    %c0_i32_0 = arith.constant 0 : i32
    return %arg0, %c0_i32 : i32, i32
  }
}

</mosaic_0001>

<llo_original>
// kernel: tpu_custom_call.1
$region0: #{tpu_custom_call.1}
  #allocation0 [shape = 'u32[]', space=smem, size = 0x4, offset = 0x4, fixed_abs, tag = 'smem constant byte address 0x4 - core index']
  #allocation1 [shape = 'u32[144,128]{1,0:T(1,128)}', space=vmem, size = 0x12000, scoped, tag = 'internal scratch']
  %s0 = inlined_call_operand.hbm [shape: f32[64,128], index: 0, kind: input, shape index: {}]
  %s1 = inlined_call_operand.hbm [shape: f32[128,128], index: 1, kind: input, shape index: {}]
  %s2 = inlined_call_operand.hbm [shape: f32[64,128], index: 2, kind: input, shape index: {}]
  %s3 = inlined_call_operand.hbm [shape: f32[128,128], index: 3, kind: input, shape index: {}]
  %s4 = inlined_call_operand.vmem [shape: f32[1,128], index: 4, kind: input, shape index: {}]
  %s5 = inlined_call_operand.hbm [shape: f32[128,512], index: 5, kind: input, shape index: {}]
  %s6 = inlined_call_operand.hbm [shape: f32[128,512], index: 6, kind: input, shape index: {}]
  %s7 = inlined_call_operand.vmem [shape: f32[1,512], index: 7, kind: input, shape index: {}]
  %s8 = inlined_call_operand.hbm [shape: f32[128,128], index: 8, kind: input, shape index: {}]
  %s9 = inlined_call_operand.vmem [shape: f32[1,128], index: 9, kind: input, shape index: {}]
  %s10 = inlined_call_operand.hbm [shape: f32[128,128], index: 10, kind: input, shape index: {}]
  %s11 = inlined_call_operand.vmem [shape: f32[1,128], index: 11, kind: input, shape index: {}]
  %s12 = inlined_call_operand.hbm [shape: f32[64,128], index: 12, kind: output, shape index: {0}]
  %s13 = inlined_call_operand.hbm [shape: f32[64,128], index: 13, kind: output, shape index: {1}]
  %14 = xla_tuple %s12, %s13
  %s15 = sld [smem:[#allocation0]]
  $region98: #{tpu_custom_call.1} parent=0
    _
  %s17 = ssub.s32 1, %s15
  %s18 = scalar_select 0, %s17, %s15
  $region1: #{tpu_custom_call.1} parent=0
    #allocation2 [shape = 'u8[32768]{0}', space=vmem, size = 0x8000, scoped, tag = 'input window, operand 0, single buffered']
    #allocation3 [shape = 's32[1]{0}', space=sflag, size = 0x4, scoped, tag = 'scoped memory for tpu_custom_call.1']
    #allocation4 [shape = 's32[1]{0}', space=sflag, size = 0x4, scoped, tag = 'scoped memory for tpu_custom_call.1']
    #allocation5 [shape = 'u8[65536]{0}', space=vmem, size = 0x10000, scoped, tag = 'input window, operand 1, single buffered']
    #allocation6 [shape = 's32[1]{0}', space=sflag, size = 0x4, scoped, tag = 'scoped memory for tpu_custom_call.1']
    #allocation7 [shape = 'u8[32768]{0}', space=vmem, size = 0x8000, scoped, tag = 'input window, operand 2, single buffered']
    #allocation8 [shape = 'u8[65536]{0}', space=vmem, size = 0x10000, scoped, tag = 'input window, operand 3, single buffered']
    #allocation9 [shape = 's32[1]{0}', space=sflag, size = 0x4, scoped, tag = 'scoped memory for tpu_custom_call.1']
    #allocation10 [shape = 'u8[262144]{0}', space=vmem, size = 0x40000, scoped, tag = 'input window, operand 5, single buffered']
    #allocation11 [shape = 'u8[262144]{0}', space=vmem, size = 0x40000, scoped, tag = 'input window, operand 6, single buffered']
    #allocation12 [shape = 's32[1]{0}', space=sflag, size = 0x4, scoped, tag = 'scoped memory for tpu_custom_call.1']
    #allocation13 [shape = 'u8[65536]{0}', space=vmem, size = 0x10000, scoped, tag = 'input window, operand 8, single buffered']
    #allocation14 [shape = 'u8[65536]{0}', space=vmem, size = 0x10000, scoped, tag = 'input window, operand 10, single buffered']
    #allocation15 [shape = 's32[1]{0}', space=sflag, size = 0x4, scoped, tag = 'scoped memory for tpu_custom_call.1']
    #allocation16 [shape = 'u8[32768]{0}', space=vmem, size = 0x8000, scoped, tag = 'output window, operand 0, single buffered']
    #allocation17 [shape = 'u8[32768]{0}', space=vmem, size = 0x8000, scoped, tag = 'output window, operand 1, single buffered']
    #allocation18 [shape = 's32[1]{0}', space=sflag, size = 0x4, scoped, tag = 'scoped memory for tpu_custom_call.1']
    %19 = vsyncpa [#allocation3], 0
    %20 = vsyncpa [#allocation6], 0
    %21 = vsyncpa [#allocation9], 0
    %22 = vsyncpa [#allocation12], 0
    %23 = vsyncpa [#allocation15], 0
    %24 = vsyncpa [#allocation4], 0
    %25 = vsyncpa [#allocation18], 0
    // Predicated region
    $region2: #{tpu_custom_call.1} parent=1 // pred_check
      _
    $region3: #{tpu_custom_call.1} parent=1 // pred_check_branch
      %27 = sbr.rel (0) target = $region5
    $region4: #{tpu_custom_call.1} parent=1 // pred_region
      %s29 = ssub.s32 1024, 1024
      %30 = vsyncadd [#allocation3], %s29
      %s31 = sshll.u32 [#allocation2], 4
      %s32 = int_to_ptr.vmem [resolvable:$true] %s31
      %37 = dma.hbm_to_vmem [thread:$0]  %s0, 1024, %s32, [#allocation3], 128, 128, 8
    $region5: #{tpu_custom_call.1} parent=1 // pred_fallthru
      _
    // Predicated region
    $region6: #{tpu_custom_call.1} parent=1 // pred_check
      _
    $region7: #{tpu_custom_call.1} parent=1 // pred_check_branch
      %39 = sbr.rel (0) target = $region9
    $region8: #{tpu_custom_call.1} parent=1 // pred_region
      %s41 = ssub.s32 2048, 2048
      %42 = vsyncadd [#allocation6], %s41
      %s43 = sshll.u32 [#allocation5], 4
      %s44 = int_to_ptr.vmem [resolvable:$true] %s43
      %49 = dma.hbm_to_vmem [thread:$0]  %s1, 2048, %s44, [#allocation6], 128, 128, 8
    $region9: #{tpu_custom_call.1} parent=1 // pred_fallthru
      _
    // Predicated region
    $region10: #{tpu_custom_call.1} parent=1 // pred_check
      _
    $region11: #{tpu_custom_call.1} parent=1 // pred_check_branch
      %51 = sbr.rel (0) target = $region13
    $region12: #{tpu_custom_call.1} parent=1 // pred_region
      %s53 = ssub.s32 1024, 1024
      %54 = vsyncadd [#allocation6], %s53
      %s55 = sshll.u32 [#allocation7], 4
      %s56 = int_to_ptr.vmem [resolvable:$true] %s55
      %61 = dma.hbm_to_vmem [thread:$0]  %s2, 1024, %s56, [#allocation6], 128, 128, 8
    $region13: #{tpu_custom_call.1} parent=1 // pred_fallthru
      _
    // Predicated region
    $region14: #{tpu_custom_call.1} parent=1 // pred_check
      _
    $region15: #{tpu_custom_call.1} parent=1 // pred_check_branch
      %63 = sbr.rel (0) target = $region17
    $region16: #{tpu_custom_call.1} parent=1 // pred_region
      %s65 = ssub.s32 2048, 2048
      %66 = vsyncadd [#allocation9], %s65
      %s67 = sshll.u32 [#allocation8], 4
      %s68 = int_to_ptr.vmem [resolvable:$true] %s67
      %73 = dma.hbm_to_vmem [thread:$0]  %s3, 2048, %s68, [#allocation9], 128, 128, 8
    $region17: #{tpu_custom_call.1} parent=1 // pred_fallthru
      _
    // Predicated region
    $region18: #{tpu_custom_call.1} parent=1 // pred_check
      _
    $region19: #{tpu_custom_call.1} parent=1 // pred_check_branch
      %75 = sbr.rel (0) target = $region21
    $region20: #{tpu_custom_call.1} parent=1 // pred_region
      _
    $region21: #{tpu_custom_call.1} parent=1 // pred_fallthru
      _
    // Predicated region
    $region22: #{tpu_custom_call.1} parent=1 // pred_check
      _
    $region23: #{tpu_custom_call.1} parent=1 // pred_check_branch
      %77 = sbr.rel (0) target = $region25
    $region24: #{tpu_custom_call.1} parent=1 // pred_region
      %s79 = ssub.s32 8192, 8192
      %80 = vsyncadd [#allocation9], %s79
      %s81 = sshll.u32 [#allocation10], 4
      %s82 = int_to_ptr.vmem [resolvable:$true] %s81
      %87 = dma.hbm_to_vmem [thread:$0]  %s5, 8192, %s82, [#allocation9], 512, 512, 32
    $region25: #{tpu_custom_call.1} parent=1 // pred_fallthru
      _
    // Predicated region
    $region26: #{tpu_custom_call.1} parent=1 // pred_check
      _
    $region27: #{tpu_custom_call.1} parent=1 // pred_check_branch
      %89 = sbr.rel (0) target = $region29
    $region28: #{tpu_custom_call.1} parent=1 // pred_region
      %s91 = ssub.s32 8192, 8192
      %92 = vsyncadd [#allocation12], %s91
      %s93 = sshll.u32 [#allocation11], 4
      %s94 = int_to_ptr.vmem [resolvable:$true] %s93
      %99 = dma.hbm_to_vmem [thread:$0]  %s6, 8192, %s94, [#allocation12], 512, 512, 32
    $region29: #{tpu_custom_call.1} parent=1 // pred_fallthru
      _
    // Predicated region
    $region30: #{tpu_custom_call.1} parent=1 // pred_check
      _
    $region31: #{tpu_custom_call.1} parent=1 // pred_check_branch
      %101 = sbr.rel (0) target = $region33
    $region32: #{tpu_custom_call.1} parent=1 // pred_region
      _
    $region33: #{tpu_custom_call.1} parent=1 // pred_fallthru
      _
    // Predicated region
    $region34: #{tpu_custom_call.1} parent=1 // pred_check
      _
    $region35: #{tpu_custom_call.1} parent=1 // pred_check_branch
      %103 = sbr.rel (0) target = $region37
    $region36: #{tpu_custom_call.1} parent=1 // pred_region
      %s105 = ssub.s32 2048, 2048
      %106 = vsyncadd [#allocation12], %s105
      %s107 = sshll.u32 [#allocation13], 4
      %s108 = int_to_ptr.vmem [resolvable:$true] %s107
      %113 = dma.hbm_to_vmem [thread:$0]  %s8, 2048, %s108, [#allocation12], 128, 128, 8
    $region37: #{tpu_custom_call.1} parent=1 // pred_fallthru
      _
    // Predicated region
    $region38: #{tpu_custom_call.1} parent=1 // pred_check
      _
    $region39: #{tpu_custom_call.1} parent=1 // pred_check_branch
      %115 = sbr.rel (0) target = $region41
    $region40: #{tpu_custom_call.1} parent=1 // pred_region
      _
    $region41: #{tpu_custom_call.1} parent=1 // pred_fallthru
      _
    // Predicated region
    $region42: #{tpu_custom_call.1} parent=1 // pred_check
      _
    $region43: #{tpu_custom_call.1} parent=1 // pred_check_branch
      %117 = sbr.rel (0) target = $region45
    $region44: #{tpu_custom_call.1} parent=1 // pred_region
      %s119 = ssub.s32 2048, 2048
      %120 = vsyncadd [#allocation15], %s119
      %s121 = sshll.u32 [#allocation14], 4
      %s122 = int_to_ptr.vmem [resolvable:$true] %s121
      %127 = dma.hbm_to_vmem [thread:$0]  %s10, 2048, %s122, [#allocation15], 128, 128, 8
    $region45: #{tpu_custom_call.1} parent=1 // pred_fallthru
      _
    // Predicated region
    $region46: #{tpu_custom_call.1} parent=1 // pred_check
      _
    $region47: #{tpu_custom_call.1} parent=1 // pred_check_branch
      %129 = sbr.rel (0) target = $region49
    $region48: #{tpu_custom_call.1} parent=1 // pred_region
      _
    $region49: #{tpu_custom_call.1} parent=1 // pred_fallthru
      _
    // Predicated region
    $region50: #{tpu_custom_call.1} parent=1 // pred_check
      _
    $region51: #{tpu_custom_call.1} parent=1 // pred_check_branch
      %131 = sbr.rel (0) target = $region53
    $region52: #{tpu_custom_call.1} parent=1 // pred_region
      %132 = dma.done [#allocation3], 1024
    $region53: #{tpu_custom_call.1} parent=1 // pred_fallthru
      _
    // Predicated region
    $region54: #{tpu_custom_call.1} parent=1 // pred_check
      _
    $region55: #{tpu_custom_call.1} parent=1 // pred_check_branch
      %134 = sbr.rel (0) target = $region57
    $region56: #{tpu_custom_call.1} parent=1 // pred_region
      %135 = dma.done [#allocation6], 2048
    $region57: #{tpu_custom_call.1} parent=1 // pred_fallthru
      _
    // Predicated region
    $region58: #{tpu_custom_call.1} parent=1 // pred_check
      _
    $region59: #{tpu_custom_call.1} parent=1 // pred_check_branch
      %137 = sbr.rel (0) target = $region61
    $region60: #{tpu_custom_call.1} parent=1 // pred_region
      %138 = dma.done [#allocation6], 1024
    $region61: #{tpu_custom_call.1} parent=1 // pred_fallthru
      _
    // Predicated region
    $region62: #{tpu_custom_call.1} parent=1 // pred_check
      _
    $region63: #{tpu_custom_call.1} parent=1 // pred_check_branch
      %140 = sbr.rel (0) target = $region65
    $region64: #{tpu_custom_call.1} parent=1 // pred_region
      %141 = dma.done [#allocation9], 2048
    $region65: #{tpu_custom_call.1} parent=1 // pred_fallthru
      _
    // Predicated region
    $region66: #{tpu_custom_call.1} parent=1 // pred_check
      _
    $region67: #{tpu_custom_call.1} parent=1 // pred_check_branch
      %143 = sbr.rel (0) target = $region69
    $region68: #{tpu_custom_call.1} parent=1 // pred_region
      %144 = dma.done [#allocation9], 8192
    $region69: #{tpu_custom_call.1} parent=1 // pred_fallthru
      _
    // Predicated region
    $region70: #{tpu_custom_call.1} parent=1 // pred_check
      _
    $region71: #{tpu_custom_call.1} parent=1 // pred_check_branch
      %146 = sbr.rel (0) target = $region73
    $region72: #{tpu_custom_call.1} parent=1 // pred_region
      %147 = dma.done [#allocation12], 8192
    $region73: #{tpu_custom_call.1} parent=1 // pred_fallthru
      _
    // Predicated region
    $region74: #{tpu_custom_call.1} parent=1 // pred_check
      _
    $region75: #{tpu_custom_call.1} parent=1 // pred_check_branch
      %149 = sbr.rel (0) target = $region77
    $region76: #{tpu_custom_call.1} parent=1 // pred_region
      %150 = dma.done [#allocation12], 2048
    $region77: #{tpu_custom_call.1} parent=1 // pred_fallthru
      _
    // Predicated region
    $region78: #{tpu_custom_call.1} parent=1 // pred_check
      _
    $region79: #{tpu_custom_call.1} parent=1 // pred_check_branch
      %152 = sbr.rel (0) target = $region81
    $region80: #{tpu_custom_call.1} parent=1 // pred_region
      %153 = dma.done [#allocation15], 2048
    $region81: #{tpu_custom_call.1} parent=1 // pred_fallthru
      _
    %v154 = vld [vmem:[#allocation2] sm:$0xff]
    %v155 = vld [vmem:[#allocation2 + $0x8] sm:$0xff]
    %v156 = vld [vmem:[#allocation2 + $0x10] sm:$0xff]
    %v157 = vld [vmem:[#allocation2 + $0x18] sm:$0xff]
    %v158 = vld [vmem:[#allocation2 + $0x20] sm:$0xff]
    %v159 = vld [vmem:[#allocation2 + $0x28] sm:$0xff]
    %v160 = vld [vmem:[#allocation2 + $0x30] sm:$0xff]
    %v161 = vld [vmem:[#allocation2 + $0x38] sm:$0xff]
    %v162 = vld [vmem:[#allocation5] sm:$0xff]
    %v163 = vld [vmem:[#allocation5 + $0x8] sm:$0xff]
    %v164 = vld [vmem:[#allocation5 + $0x10] sm:$0xff]
    %v165 = vld [vmem:[#allocation5 + $0x18] sm:$0xff]
    %v166 = vld [vmem:[#allocation5 + $0x20] sm:$0xff]
    %v167 = vld [vmem:[#allocation5 + $0x28] sm:$0xff]
    %v168 = vld [vmem:[#allocation5 + $0x30] sm:$0xff]
    %v169 = vld [vmem:[#allocation5 + $0x38] sm:$0xff]
    %v170 = vld [vmem:[#allocation5 + $0x40] sm:$0xff]
    %v171 = vld [vmem:[#allocation5 + $0x48] sm:$0xff]
    %v172 = vld [vmem:[#allocation5 + $0x50] sm:$0xff]
    %v173 = vld [vmem:[#allocation5 + $0x58] sm:$0xff]
    %v174 = vld [vmem:[#allocation5 + $0x60] sm:$0xff]
    %v175 = vld [vmem:[#allocation5 + $0x68] sm:$0xff]
    %v176 = vld [vmem:[#allocation5 + $0x70] sm:$0xff]
    %v177 = vld [vmem:[#allocation5 + $0x78] sm:$0xff]
    %178 = vmatprep.subr.mxu0 0.0
    %179 = vmatpush1.msra.mxu0 %v162
    %180 = vmatprep.subr.mxu0 0.0
    %181 = vmatpush1.msra.mxu0 %v163
    %182 = vmatprep.subr.mxu0 0.0
    %183 = vmatpush1.msra.mxu0 %v164
    %184 = vmatprep.subr.mxu0 0.0
    %185 = vmatpush1.msra.mxu0 %v165
    %186 = vmatprep.subr.mxu0 0.0
    %187 = vmatpush1.msra.mxu0 %v166
    %188 = vmatprep.subr.mxu0 0.0
    %189 = vmatpush1.msra.mxu0 %v167
    %190 = vmatprep.subr.mxu0 0.0
    %191 = vmatpush1.msra.mxu0 %v168
    %192 = vmatprep.subr.mxu0 0.0
    %193 = vmatpush1.msra.mxu0 %v169
    %194 = vmatprep.subr.mxu0 0.0
    %195 = vmatpush1.msra.mxu0 %v170
    %196 = vmatprep.subr.mxu0 0.0
    %197 = vmatpush1.msra.mxu0 %v171
    %198 = vmatprep.subr.mxu0 0.0
    %199 = vmatpush1.msra.mxu0 %v172
    %200 = vmatprep.subr.mxu0 0.0
    %201 = vmatpush1.msra.mxu0 %v173
    %202 = vmatprep.subr.mxu0 0.0
    %203 = vmatpush1.msra.mxu0 %v174
    %204 = vmatprep.subr.mxu0 0.0
    %205 = vmatpush1.msra.mxu0 %v175
    %206 = vmatprep.subr.mxu0 0.0
    %207 = vmatpush1.msra.mxu0 %v176
    %208 = vmatprep.subr.mxu0 0.0
    %209 = vmatpush1.msra.mxu0 %v177
    %210 = vmatprep.subr.mxu0 0.0
    %211 = vmatpush1.msra.mxu0 0.0
    %212 = vmatprep.subr.mxu0 0.0
    %213 = vmatpush1.msra.mxu0 0.0
    %214 = vmatprep.subr.mxu0 0.0
    %215 = vmatpush1.msra.mxu0 0.0
    %216 = vmatprep.subr.mxu0 0.0
    %217 = vmatpush1.msra.mxu0 0.0
    %218 = vmatprep.subr.mxu0 0.0
    %219 = vmatpush1.msra.mxu0 0.0
    %220 = vmatprep.subr.mxu0 0.0
    %221 = vmatpush1.msra.mxu0 0.0
    %222 = vmatprep.subr.mxu0 0.0
    %223 = vmatpush1.msra.mxu0 0.0
    %224 = vmatprep.subr.mxu0 0.0
    %225 = vmatpush1.msra.mxu0 0.0
    %226 = vmatprep.subr.mxu0 0.0
    %227 = vmatpush1.msra.mxu0 0.0
    %228 = vmatprep.subr.mxu0 0.0
    %229 = vmatpush1.msra.mxu0 0.0
    %230 = vmatprep.subr.mxu0 0.0
    %231 = vmatpush1.msra.mxu0 0.0
    %232 = vmatprep.subr.mxu0 0.0
    %233 = vmatpush1.msra.mxu0 0.0
    %234 = vmatprep.subr.mxu0 0.0
    %235 = vmatpush1.msra.mxu0 0.0
    %236 = vmatprep.subr.mxu0 0.0
    %237 = vmatpush1.msra.mxu0 0.0
    %238 = vmatprep.subr.mxu0 0.0
    %239 = vmatpush1.msra.mxu0 0.0
    %240 = vmatprep.subr.mxu0 0.0
    %241 = vmatpush1.msra.mxu0 0.0
    %242 = vmatprep.mubr.f32.mxu0 0.0
    %243 = vmatmul.mubr.f32.gmra.mrb[0].mxu0 %v154
    %v244 = vpop.f32.mrb[0].mxu0
    %v245 = vadd.f32 0.0, %v244
    %v246 = vpop.f32.mrb[0].mxu0
    %247 = vmatprep.mubr.f32.mxu0 0.0
    %248 = vmatmul.mubr.f32.gmra.mrb[0].mxu0 %v155
    %v249 = vpop.f32.mrb[0].mxu0
    %v250 = vadd.f32 0.0, %v249
    %v251 = vpop.f32.mrb[0].mxu0
    %252 = vmatprep.mubr.f32.mxu0 0.0
    %253 = vmatmul.mubr.f32.gmra.mrb[0].mxu0 %v156
    %v254 = vpop.f32.mrb[0].mxu0
    %v255 = vadd.f32 0.0, %v254
    %v256 = vpop.f32.mrb[0].mxu0
    %257 = vmatprep.mubr.f32.mxu0 0.0
    %258 = vmatmul.mubr.f32.gmra.mrb[0].mxu0 %v157
    %v259 = vpop.f32.mrb[0].mxu0
    %v260 = vadd.f32 0.0, %v259
    %v261 = vpop.f32.mrb[0].mxu0
    %262 = vmatprep.mubr.f32.mxu0 0.0
    %263 = vmatmul.mubr.f32.gmra.mrb[0].mxu0 %v158
    %v264 = vpop.f32.mrb[0].mxu0
    %v265 = vadd.f32 0.0, %v264
    %v266 = vpop.f32.mrb[0].mxu0
    %267 = vmatprep.mubr.f32.mxu0 0.0
    %268 = vmatmul.mubr.f32.gmra.mrb[0].mxu0 %v159
    %v269 = vpop.f32.mrb[0].mxu0
    %v270 = vadd.f32 0.0, %v269
    %v271 = vpop.f32.mrb[0].mxu0
    %272 = vmatprep.mubr.f32.mxu0 0.0
    %273 = vmatmul.mubr.f32.gmra.mrb[0].mxu0 %v160
    %v274 = vpop.f32.mrb[0].mxu0
    %v275 = vadd.f32 0.0, %v274
    %v276 = vpop.f32.mrb[0].mxu0
    %277 = vmatprep.mubr.f32.mxu0 0.0
    %278 = vmatmul.mubr.f32.gmra.mrb[0].mxu0 %v161
    %v279 = vpop.f32.mrb[0].mxu0
    %v280 = vadd.f32 0.0, %v279
    %v281 = vpop.f32.mrb[0].mxu0
    %282 = vdwg.mxu0
    %v283 = vld [vmem:[#allocation8] sm:$0xff]
    %v284 = vld [vmem:[#allocation8 + $0x8] sm:$0xff]
    %v285 = vld [vmem:[#allocation8 + $0x10] sm:$0xff]
    %v286 = vld [vmem:[#allocation8 + $0x18] sm:$0xff]
    %v287 = vld [vmem:[#allocation8 + $0x20] sm:$0xff]
    %v288 = vld [vmem:[#allocation8 + $0x28] sm:$0xff]
    %v289 = vld [vmem:[#allocation8 + $0x30] sm:$0xff]
    %v290 = vld [vmem:[#allocation8 + $0x38] sm:$0xff]
    %v291 = vld [vmem:[#allocation8 + $0x40] sm:$0xff]
    %v292 = vld [vmem:[#allocation8 + $0x48] sm:$0xff]
    %v293 = vld [vmem:[#allocation8 + $0x50] sm:$0xff]
    %v294 = vld [vmem:[#allocation8 + $0x58] sm:$0xff]
    %v295 = vld [vmem:[#allocation8 + $0x60] sm:$0xff]
    %v296 = vld [vmem:[#allocation8 + $0x68] sm:$0xff]
    %v297 = vld [vmem:[#allocation8 + $0x70] sm:$0xff]
    %v298 = vld [vmem:[#allocation8 + $0x78] sm:$0xff]
    %v299 = vld [vmem:[%s4] sm:$0x1]
    %v301 = vlaneseq
    %v302 = vshrl.u32 %v301, 7
    %v303 = vsub.s32 0, %v302
    %v304 = vrot.slane %v299, %v303
    %306 = vmatprep.subr.mxu0 0.0
    %307 = vmatpush1.msra.mxu0 %v283
    %308 = vmatprep.subr.mxu0 0.0
    %309 = vmatpush1.msra.mxu0 %v284
    %310 = vmatprep.subr.mxu0 0.0
    %311 = vmatpush1.msra.mxu0 %v285
    %312 = vmatprep.subr.mxu0 0.0
    %313 = vmatpush1.msra.mxu0 %v286
    %314 = vmatprep.subr.mxu0 0.0
    %315 = vmatpush1.msra.mxu0 %v287
    %316 = vmatprep.subr.mxu0 0.0
    %317 = vmatpush1.msra.mxu0 %v288
    %318 = vmatprep.subr.mxu0 0.0
    %319 = vmatpush1.msra.mxu0 %v289
    %320 = vmatprep.subr.mxu0 0.0
    %321 = vmatpush1.msra.mxu0 %v290
    %322 = vmatprep.subr.mxu0 0.0
    %323 = vmatpush1.msra.mxu0 %v291
    %324 = vmatprep.subr.mxu0 0.0
    %325 = vmatpush1.msra.mxu0 %v292
    %326 = vmatprep.subr.mxu0 0.0
    %327 = vmatpush1.msra.mxu0 %v293
    %328 = vmatprep.subr.mxu0 0.0
    %329 = vmatpush1.msra.mxu0 %v294
    %330 = vmatprep.subr.mxu0 0.0
    %331 = vmatpush1.msra.mxu0 %v295
    %332 = vmatprep.subr.mxu0 0.0
    %333 = vmatpush1.msra.mxu0 %v296
    %334 = vmatprep.subr.mxu0 0.0
    %335 = vmatpush1.msra.mxu0 %v297
    %336 = vmatprep.subr.mxu0 0.0
    %337 = vmatpush1.msra.mxu0 %v298
    %338 = vmatprep.subr.mxu0 0.0
    %339 = vmatpush1.msra.mxu0 0.0
    %340 = vmatprep.subr.mxu0 0.0
    %341 = vmatpush1.msra.mxu0 0.0
    %342 = vmatprep.subr.mxu0 0.0
    %343 = vmatpush1.msra.mxu0 0.0
    %344 = vmatprep.subr.mxu0 0.0
    %345 = vmatpush1.msra.mxu0 0.0
    %346 = vmatprep.subr.mxu0 0.0
    %347 = vmatpush1.msra.mxu0 0.0
    %348 = vmatprep.subr.mxu0 0.0
    %349 = vmatpush1.msra.mxu0 0.0
    %350 = vmatprep.subr.mxu0 0.0
    %351 = vmatpush1.msra.mxu0 0.0
    %352 = vmatprep.subr.mxu0 0.0
    %353 = vmatpush1.msra.mxu0 0.0
    %354 = vmatprep.subr.mxu0 0.0
    %355 = vmatpush1.msra.mxu0 0.0
    %356 = vmatprep.subr.mxu0 0.0
    %357 = vmatpush1.msra.mxu0 0.0
    %358 = vmatprep.subr.mxu0 0.0
    %359 = vmatpush1.msra.mxu0 0.0
    %360 = vmatprep.subr.mxu0 0.0
    %361 = vmatpush1.msra.mxu0 0.0
    %362 = vmatprep.subr.mxu0 0.0
    %363 = vmatpush1.msra.mxu0 0.0
    %364 = vmatprep.subr.mxu0 0.0
    %365 = vmatpush1.msra.mxu0 0.0
    %366 = vmatprep.subr.mxu0 0.0
    %367 = vmatpush1.msra.mxu0 0.0
    %368 = vmatprep.subr.mxu0 0.0
    %369 = vmatpush1.msra.mxu0 0.0
    %370 = vmatprep.mubr.f32.mxu0 0.0
    %371 = vmatmul.mubr.f32.gmra.mrb[0].mxu0 %v245
    %v372 = vpop.f32.mrb[0].mxu0
    %v373 = vadd.f32 %v304, %v372
    %v374 = vpop.f32.mrb[0].mxu0
    %375 = vmatprep.mubr.f32.mxu0 0.0
    %376 = vmatmul.mubr.f32.gmra.mrb[0].mxu0 %v250
    %v377 = vpop.f32.mrb[0].mxu0
    %v378 = vadd.f32 %v304, %v377
    %v379 = vpop.f32.mrb[0].mxu0
    %380 = vmatprep.mubr.f32.mxu0 0.0
    %381 = vmatmul.mubr.f32.gmra.mrb[0].mxu0 %v255
    %v382 = vpop.f32.mrb[0].mxu0
    %v383 = vadd.f32 %v304, %v382
    %v384 = vpop.f32.mrb[0].mxu0
    %385 = vmatprep.mubr.f32.mxu0 0.0
    %386 = vmatmul.mubr.f32.gmra.mrb[0].mxu0 %v260
    %v387 = vpop.f32.mrb[0].mxu0
    %v388 = vadd.f32 %v304, %v387
    %v389 = vpop.f32.mrb[0].mxu0
    %390 = vmatprep.mubr.f32.mxu0 0.0
    %391 = vmatmul.mubr.f32.gmra.mrb[0].mxu0 %v265
    %v392 = vpop.f32.mrb[0].mxu0
    %v393 = vadd.f32 %v304, %v392
    %v394 = vpop.f32.mrb[0].mxu0
    %395 = vmatprep.mubr.f32.mxu0 0.0
    %396 = vmatmul.mubr.f32.gmra.mrb[0].mxu0 %v270
    %v397 = vpop.f32.mrb[0].mxu0
    %v398 = vadd.f32 %v304, %v397
    %v399 = vpop.f32.mrb[0].mxu0
    %400 = vmatprep.mubr.f32.mxu0 0.0
    %401 = vmatmul.mubr.f32.gmra.mrb[0].mxu0 %v275
    %v402 = vpop.f32.mrb[0].mxu0
    %v403 = vadd.f32 %v304, %v402
    %v404 = vpop.f32.mrb[0].mxu0
    %405 = vmatprep.mubr.f32.mxu0 0.0
    %406 = vmatmul.mubr.f32.gmra.mrb[0].mxu0 %v280
    %v407 = vpop.f32.mrb[0].mxu0
    %v408 = vadd.f32 %v304, %v407
    %v409 = vpop.f32.mrb[0].mxu0
    %410 = vdwg.mxu0
    %v411 = vmax.f32 %v373, 0.0
    %v412 = vmax.f32 %v378, 0.0
    %v413 = vmax.f32 %v383, 0.0
    %v414 = vmax.f32 %v388, 0.0
    %v415 = vmax.f32 %v393, 0.0
    %v416 = vmax.f32 %v398, 0.0
    %v417 = vmax.f32 %v403, 0.0
    %v418 = vmax.f32 %v408, 0.0
    %v419 = vld [vmem:[#allocation7] sm:$0xff]
    %v420 = vld [vmem:[#allocation7 + $0x8] sm:$0xff]
    %v421 = vld [vmem:[#allocation7 + $0x10] sm:$0xff]
    %v422 = vld [vmem:[#allocation7 + $0x18] sm:$0xff]
    %v423 = vld [vmem:[#allocation7 + $0x20] sm:$0xff]
    %v424 = vld [vmem:[#allocation7 + $0x28] sm:$0xff]
    %v425 = vld [vmem:[#allocation7 + $0x30] sm:$0xff]
    %v426 = vld [vmem:[#allocation7 + $0x38] sm:$0xff]
    %v427 = vld [vmem:[#allocation10] sm:$0xff]
    %v428 = vld [vmem:[#allocation10 + $0x8] sm:$0xff]
    %v429 = vld [vmem:[#allocation10 + $0x10] sm:$0xff]
    %v430 = vld [vmem:[#allocation10 + $0x18] sm:$0xff]
    %v431 = vld [vmem:[#allocation10 + $0x20] sm:$0xff]
    %v432 = vld [vmem:[#allocation10 + $0x28] sm:$0xff]
    %v433 = vld [vmem:[#allocation10 + $0x30] sm:$0xff]
    %v434 = vld [vmem:[#allocation10 + $0x38] sm:$0xff]
    %v435 = vld [vmem:[#allocation10 + $0x40] sm:$0xff]
    %v436 = vld [vmem:[#allocation10 + $0x48] sm:$0xff]
    %v437 = vld [vmem:[#allocation10 + $0x50] sm:$0xff]
    %v438 = vld [vmem:[#allocation10 + $0x58] sm:$0xff]
    %v439 = vld [vmem:[#allocation10 + $0x60] sm:$0xff]
    %v440 = vld [vmem:[#allocation10 + $0x68] sm:$0xff]
    %v441 = vld [vmem:[#allocation10 + $0x70] sm:$0xff]
    %v442 = vld [vmem:[#allocation10 + $0x78] sm:$0xff]
    %v443 = vld [vmem:[#allocation10 + $0x80] sm:$0xff]
    %v444 = vld [vmem:[#allocation10 + $0x88] sm:$0xff]
    %v445 = vld [vmem:[#allocation10 + $0x90] sm:$0xff]
    %v446 = vld [vmem:[#allocation10 + $0x98] sm:$0xff]
    %v447 = vld [vmem:[#allocation10 + $0xa0] sm:$0xff]
    %v448 = vld [vmem:[#allocation10 + $0xa8] sm:$0xff]
    %v449 = vld [vmem:[#allocation10 + $0xb0] sm:$0xff]
    %v450 = vld [vmem:[#allocation10 + $0xb8] sm:$0xff]
    %v451 = vld [vmem:[#allocation10 + $0xc0] sm:$0xff]
    %v452 = vld [vmem:[#allocation10 + $0xc8] sm:$0xff]
    %v453 = vld [vmem:[#allocation10 + $0xd0] sm:$0xff]
    %v454 = vld [vmem:[#allocation10 + $0xd8] sm:$0xff]
    %v455 = vld [vmem:[#allocation10 + $0xe0] sm:$0xff]
    %v456 = vld [vmem:[#allocation10 + $0xe8] sm:$0xff]
    %v457 = vld [vmem:[#allocation10 + $0xf0] sm:$0xff]
    %v458 = vld [vmem:[#allocation10 + $0xf8] sm:$0xff]
    %v459 = vld [vmem:[#allocation10 + $0x100] sm:$0xff]
    %v460 = vld [vmem:[#allocation10 + $0x108] sm:$0xff]
    %v461 = vld [vmem:[#allocation10 + $0x110] sm:$0xff]
    %v462 = vld [vmem:[#allocation10 + $0x118] sm:$0xff]
    %v463 = vld [vmem:[#allocation10 + $0x120] sm:$0xff]
    %v464 = vld [vmem:[#allocation10 + $0x128] sm:$0xff]
    %v465 = vld [vmem:[#allocation10 + $0x130] sm:$0xff]
    %v466 = vld [vmem:[#allocation10 + $0x138] sm:$0xff]
    %v467 = vld [vmem:[#allocation10 + $0x140] sm:$0xff]
    %v468 = vld [vmem:[#allocation10 + $0x148] sm:$0xff]
    %v469 = vld [vmem:[#allocation10 + $0x150] sm:$0xff]
    %v470 = vld [vmem:[#allocation10 + $0x158] sm:$0xff]
    %v471 = vld [vmem:[#allocation10 + $0x160] sm:$0xff]
    %v472 = vld [vmem:[#allocation10 + $0x168] sm:$0xff]
    %v473 = vld [vmem:[#allocation10 + $0x170] sm:$0xff]
    %v474 = vld [vmem:[#allocation10 + $0x178] sm:$0xff]
    %v475 = vld [vmem:[#allocation10 + $0x180] sm:$0xff]
    %v476 = vld [vmem:[#allocation10 + $0x188] sm:$0xff]
    %v477 = vld [vmem:[#allocation10 + $0x190] sm:$0xff]
    %v478 = vld [vmem:[#allocation10 + $0x198] sm:$0xff]
    %v479 = vld [vmem:[#allocation10 + $0x1a0] sm:$0xff]
    %v480 = vld [vmem:[#allocation10 + $0x1a8] sm:$0xff]
    %v481 = vld [vmem:[#allocation10 + $0x1b0] sm:$0xff]
    %v482 = vld [vmem:[#allocation10 + $0x1b8] sm:$0xff]
    %v483 = vld [vmem:[#allocation10 + $0x1c0] sm:$0xff]
    %v484 = vld [vmem:[#allocation10 + $0x1c8] sm:$0xff]
    %v485 = vld [vmem:[#allocation10 + $0x1d0] sm:$0xff]
    %v486 = vld [vmem:[#allocation10 + $0x1d8] sm:$0xff]
    %v487 = vld [vmem:[#allocation10 + $0x1e0] sm:$0xff]
    %v488 = vld [vmem:[#allocation10 + $0x1e8] sm:$0xff]
    %v489 = vld [vmem:[#allocation10 + $0x1f0] sm:$0xff]
    %v490 = vld [vmem:[#allocation10 + $0x1f8] sm:$0xff]
    %v491 = vld [vmem:[#allocation11] sm:$0xff]
    %v492 = vld [vmem:[#allocation11 + $0x8] sm:$0xff]
    %v493 = vld [vmem:[#allocation11 + $0x10] sm:$0xff]
    %v494 = vld [vmem:[#allocation11 + $0x18] sm:$0xff]
    %v495 = vld [vmem:[#allocation11 + $0x20] sm:$0xff]
    %v496 = vld [vmem:[#allocation11 + $0x28] sm:$0xff]
    %v497 = vld [vmem:[#allocation11 + $0x30] sm:$0xff]
    %v498 = vld [vmem:[#allocation11 + $0x38] sm:$0xff]
    %v499 = vld [vmem:[#allocation11 + $0x40] sm:$0xff]
    %v500 = vld [vmem:[#allocation11 + $0x48] sm:$0xff]
    %v501 = vld [vmem:[#allocation11 + $0x50] sm:$0xff]
    %v502 = vld [vmem:[#allocation11 + $0x58] sm:$0xff]
    %v503 = vld [vmem:[#allocation11 + $0x60] sm:$0xff]
    %v504 = vld [vmem:[#allocation11 + $0x68] sm:$0xff]
    %v505 = vld [vmem:[#allocation11 + $0x70] sm:$0xff]
    %v506 = vld [vmem:[#allocation11 + $0x78] sm:$0xff]
    %v507 = vld [vmem:[#allocation11 + $0x80] sm:$0xff]
    %v508 = vld [vmem:[#allocation11 + $0x88] sm:$0xff]
    %v509 = vld [vmem:[#allocation11 + $0x90] sm:$0xff]
    %v510 = vld [vmem:[#allocation11 + $0x98] sm:$0xff]
    %v511 = vld [vmem:[#allocation11 + $0xa0] sm:$0xff]
    %v512 = vld [vmem:[#allocation11 + $0xa8] sm:$0xff]
    %v513 = vld [vmem:[#allocation11 + $0xb0] sm:$0xff]
    %v514 = vld [vmem:[#allocation11 + $0xb8] sm:$0xff]
    %v515 = vld [vmem:[#allocation11 + $0xc0] sm:$0xff]
    %v516 = vld [vmem:[#allocation11 + $0xc8] sm:$0xff]
    %v517 = vld [vmem:[#allocation11 + $0xd0] sm:$0xff]
    %v518 = vld [vmem:[#allocation11 + $0xd8] sm:$0xff]
    %v519 = vld [vmem:[#allocation11 + $0xe0] sm:$0xff]
    %v520 = vld [vmem:[#allocation11 + $0xe8] sm:$0xff]
    %v521 = vld [vmem:[#allocation11 + $0xf0] sm:$0xff]
    %v522 = vld [vmem:[#allocation11 + $0xf8] sm:$0xff]
    %v523 = vld [vmem:[#allocation11 + $0x100] sm:$0xff]
    %v524 = vld [vmem:[#allocation11 + $0x108] sm:$0xff]
    %v525 = vld [vmem:[#allocation11 + $0x110] sm:$0xff]
    %v526 = vld [vmem:[#allocation11 + $0x118] sm:$0xff]
    %v527 = vld [vmem:[#allocation11 + $0x120] sm:$0xff]
    %v528 = vld [vmem:[#allocation11 + $0x128] sm:$0xff]
    %v529 = vld [vmem:[#allocation11 + $0x130] sm:$0xff]
    %v530 = vld [vmem:[#allocation11 + $0x138] sm:$0xff]
    %v531 = vld [vmem:[#allocation11 + $0x140] sm:$0xff]
    %v532 = vld [vmem:[#allocation11 + $0x148] sm:$0xff]
    %v533 = vld [vmem:[#allocation11 + $0x150] sm:$0xff]
    %v534 = vld [vmem:[#allocation11 + $0x158] sm:$0xff]
    %v535 = vld [vmem:[#allocation11 + $0x160] sm:$0xff]
    %v536 = vld [vmem:[#allocation11 + $0x168] sm:$0xff]
    %v537 = vld [vmem:[#allocation11 + $0x170] sm:$0xff]
    %v538 = vld [vmem:[#allocation11 + $0x178] sm:$0xff]
    %v539 = vld [vmem:[#allocation11 + $0x180] sm:$0xff]
    %v540 = vld [vmem:[#allocation11 + $0x188] sm:$0xff]
    %v541 = vld [vmem:[#allocation11 + $0x190] sm:$0xff]
    %v542 = vld [vmem:[#allocation11 + $0x198] sm:$0xff]
    %v543 = vld [vmem:[#allocation11 + $0x1a0] sm:$0xff]
    %v544 = vld [vmem:[#allocation11 + $0x1a8] sm:$0xff]
    %v545 = vld [vmem:[#allocation11 + $0x1b0] sm:$0xff]
    %v546 = vld [vmem:[#allocation11 + $0x1b8] sm:$0xff]
    %v547 = vld [vmem:[#allocation11 + $0x1c0] sm:$0xff]
    %v548 = vld [vmem:[#allocation11 + $0x1c8] sm:$0xff]
    %v549 = vld [vmem:[#allocation11 + $0x1d0] sm:$0xff]
    %v550 = vld [vmem:[#allocation11 + $0x1d8] sm:$0xff]
    %v551 = vld [vmem:[#allocation11 + $0x1e0] sm:$0xff]
    %v552 = vld [vmem:[#allocation11 + $0x1e8] sm:$0xff]
    %v553 = vld [vmem:[#allocation11 + $0x1f0] sm:$0xff]
    %v554 = vld [vmem:[#allocation11 + $0x1f8] sm:$0xff]
    %555 = vmatprep.subr.mxu0 %v492
    %556 = vmatpush1.msra.mxu0 %v491
    %557 = vmatprep.subr.mxu0 %v496
    %558 = vmatpush1.msra.mxu0 %v495
    %559 = vmatprep.subr.mxu0 %v500
    %560 = vmatpush1.msra.mxu0 %v499
    %561 = vmatprep.subr.mxu0 %v504
    %562 = vmatpush1.msra.mxu0 %v503
    %563 = vmatprep.subr.mxu0 %v508
    %564 = vmatpush1.msra.mxu0 %v507
    %565 = vmatprep.subr.mxu0 %v512
    %566 = vmatpush1.msra.mxu0 %v511
    %567 = vmatprep.subr.mxu0 %v516
    %568 = vmatpush1.msra.mxu0 %v515
    %569 = vmatprep.subr.mxu0 %v520
    %570 = vmatpush1.msra.mxu0 %v519
    %571 = vmatprep.subr.mxu0 %v524
    %572 = vmatpush1.msra.mxu0 %v523
    %573 = vmatprep.subr.mxu0 %v528
    %574 = vmatpush1.msra.mxu0 %v527
    %575 = vmatprep.subr.mxu0 %v532
    %576 = vmatpush1.msra.mxu0 %v531
    %577 = vmatprep.subr.mxu0 %v536
    %578 = vmatpush1.msra.mxu0 %v535
    %579 = vmatprep.subr.mxu0 %v540
    %580 = vmatpush1.msra.mxu0 %v539
    %581 = vmatprep.subr.mxu0 %v544
    %582 = vmatpush1.msra.mxu0 %v543
    %583 = vmatprep.subr.mxu0 %v548
    %584 = vmatpush1.msra.mxu0 %v547
    %585 = vmatprep.subr.mxu0 %v552
    %586 = vmatpush1.msra.mxu0 %v551
    %587 = vmatprep.subr.mxu0 0.0
    %588 = vmatpush1.msra.mxu0 0.0
    %589 = vmatprep.subr.mxu0 0.0
    %590 = vmatpush1.msra.mxu0 0.0
    %591 = vmatprep.subr.mxu0 0.0
    %592 = vmatpush1.msra.mxu0 0.0
    %593 = vmatprep.subr.mxu0 0.0
    %594 = vmatpush1.msra.mxu0 0.0
    %595 = vmatprep.subr.mxu0 0.0
    %596 = vmatpush1.msra.mxu0 0.0
    %597 = vmatprep.subr.mxu0 0.0
    %598 = vmatpush1.msra.mxu0 0.0
    %599 = vmatprep.subr.mxu0 0.0
    %600 = vmatpush1.msra.mxu0 0.0
    %601 = vmatprep.subr.mxu0 0.0
    %602 = vmatpush1.msra.mxu0 0.0
    %603 = vmatprep.subr.mxu0 0.0
    %604 = vmatpush1.msra.mxu0 0.0
    %605 = vmatprep.subr.mxu0 0.0
    %606 = vmatpush1.msra.mxu0 0.0
    %607 = vmatprep.subr.mxu0 0.0
    %608 = vmatpush1.msra.mxu0 0.0
    %609 = vmatprep.subr.mxu0 0.0
    %610 = vmatpush1.msra.mxu0 0.0
    %611 = vmatprep.subr.mxu0 0.0
    %612 = vmatpush1.msra.mxu0 0.0
    %613 = vmatprep.subr.mxu0 0.0
    %614 = vmatpush1.msra.mxu0 0.0
    %615 = vmatprep.subr.mxu0 0.0
    %616 = vmatpush1.msra.mxu0 0.0
    %617 = vmatprep.subr.mxu0 0.0
    %618 = vmatpush1.msra.mxu0 0.0
    %619 = vmatprep.mubr.f32.mxu0 0.0
    %620 = vmatmul.mubr.f32.gmra.mrb[0].mxu0 %v419
    %v621 = vpop.f32.mrb[0].mxu0
    %v622 = vadd.f32 0.0, %v621
    %v623 = vpop.f32.mrb[0].mxu0
    %v624 = vadd.f32 0.0, %v623
    %625 = vmatprep.mubr.f32.mxu0 0.0
    %626 = vmatmul.mubr.f32.gmra.mrb[0].mxu0 %v420
    %v627 = vpop.f32.mrb[0].mxu0
    %v628 = vadd.f32 0.0, %v627
    %v629 = vpop.f32.mrb[0].mxu0
    %v630 = vadd.f32 0.0, %v629
    %631 = vmatprep.mubr.f32.mxu0 0.0
    %632 = vmatmul.mubr.f32.gmra.mrb[0].mxu0 %v421
    %v633 = vpop.f32.mrb[0].mxu0
    %v634 = vadd.f32 0.0, %v633
    %v635 = vpop.f32.mrb[0].mxu0
    %v636 = vadd.f32 0.0, %v635
    %637 = vmatprep.mubr.f32.mxu0 0.0
    %638 = vmatmul.mubr.f32.gmra.mrb[0].mxu0 %v422
    %v639 = vpop.f32.mrb[0].mxu0
    %v640 = vadd.f32 0.0, %v639
    %v641 = vpop.f32.mrb[0].mxu0
    %v642 = vadd.f32 0.0, %v641
    %643 = vmatprep.mubr.f32.mxu0 0.0
    %644 = vmatmul.mubr.f32.gmra.mrb[0].mxu0 %v423
    %v645 = vpop.f32.mrb[0].mxu0
    %v646 = vadd.f32 0.0, %v645
    %v647 = vpop.f32.mrb[0].mxu0
    %v648 = vadd.f32 0.0, %v647
    %649 = vmatprep.mubr.f32.mxu0 0.0
    %650 = vmatmul.mubr.f32.gmra.mrb[0].mxu0 %v424
    %v651 = vpop.f32.mrb[0].mxu0
    %v652 = vadd.f32 0.0, %v651
    %v653 = vpop.f32.mrb[0].mxu0
    %v654 = vadd.f32 0.0, %v653
    %655 = vmatprep.mubr.f32.mxu0 0.0
    %656 = vmatmul.mubr.f32.gmra.mrb[0].mxu0 %v425
    %v657 = vpop.f32.mrb[0].mxu0
    %v658 = vadd.f32 0.0, %v657
    %v659 = vpop.f32.mrb[0].mxu0
    %v660 = vadd.f32 0.0, %v659
    %661 = vmatprep.mubr.f32.mxu0 0.0
    %662 = vmatmul.mubr.f32.gmra.mrb[0].mxu0 %v426
    %v663 = vpop.f32.mrb[0].mxu0
    %v664 = vadd.f32 0.0, %v663
    %v665 = vpop.f32.mrb[0].mxu0
    %v666 = vadd.f32 0.0, %v665
    %667 = vdwg.mxu0
    %668 = vmatprep.subr.mxu0 %v494
    %669 = vmatpush1.msra.mxu0 %v493
    %670 = vmatprep.subr.mxu0 %v498
    %671 = vmatpush1.msra.mxu0 %v497
    %672 = vmatprep.subr.mxu0 %v502
    %673 = vmatpush1.msra.mxu0 %v501
    %674 = vmatprep.subr.mxu0 %v506
    %675 = vmatpush1.msra.mxu0 %v505
    %676 = vmatprep.subr.mxu0 %v510
    %677 = vmatpush1.msra.mxu0 %v509
    %678 = vmatprep.subr.mxu0 %v514
    %679 = vmatpush1.msra.mxu0 %v513
    %680 = vmatprep.subr.mxu0 %v518
    %681 = vmatpush1.msra.mxu0 %v517
    %682 = vmatprep.subr.mxu0 %v522
    %683 = vmatpush1.msra.mxu0 %v521
    %684 = vmatprep.subr.mxu0 %v526
    %685 = vmatpush1.msra.mxu0 %v525
    %686 = vmatprep.subr.mxu0 %v530
    %687 = vmatpush1.msra.mxu0 %v529
    %688 = vmatprep.subr.mxu0 %v534
    %689 = vmatpush1.msra.mxu0 %v533
    %690 = vmatprep.subr.mxu0 %v538
    %691 = vmatpush1.msra.mxu0 %v537
    %692 = vmatprep.subr.mxu0 %v542
    %693 = vmatpush1.msra.mxu0 %v541
    %694 = vmatprep.subr.mxu0 %v546
    %695 = vmatpush1.msra.mxu0 %v545
    %696 = vmatprep.subr.mxu0 %v550
    %697 = vmatpush1.msra.mxu0 %v549
    %698 = vmatprep.subr.mxu0 %v554
    %699 = vmatpush1.msra.mxu0 %v553
    %700 = vmatprep.subr.mxu0 0.0
    %701 = vmatpush1.msra.mxu0 0.0
    %702 = vmatprep.subr.mxu0 0.0
    %703 = vmatpush1.msra.mxu0 0.0
    %704 = vmatprep.subr.mxu0 0.0
    %705 = vmatpush1.msra.mxu0 0.0
    %706 = vmatprep.subr.mxu0 0.0
    %707 = vmatpush1.msra.mxu0 0.0
    %708 = vmatprep.subr.mxu0 0.0
    %709 = vmatpush1.msra.mxu0 0.0
    %710 = vmatprep.subr.mxu0 0.0
    %711 = vmatpush1.msra.mxu0 0.0
    %712 = vmatprep.subr.mxu0 0.0
    %713 = vmatpush1.msra.mxu0 0.0
    %714 = vmatprep.subr.mxu0 0.0
    %715 = vmatpush1.msra.mxu0 0.0
    %716 = vmatprep.subr.mxu0 0.0
    %717 = vmatpush1.msra.mxu0 0.0
    %718 = vmatprep.subr.mxu0 0.0
    %719 = vmatpush1.msra.mxu0 0.0
    %720 = vmatprep.subr.mxu0 0.0
    %721 = vmatpush1.msra.mxu0 0.0
    %722 = vmatprep.subr.mxu0 0.0
    %723 = vmatpush1.msra.mxu0 0.0
    %724 = vmatprep.subr.mxu0 0.0
    %725 = vmatpush1.msra.mxu0 0.0
    %726 = vmatprep.subr.mxu0 0.0
    %727 = vmatpush1.msra.mxu0 0.0
    %728 = vmatprep.subr.mxu0 0.0
    %729 = vmatpush1.msra.mxu0 0.0
    %730 = vmatprep.subr.mxu0 0.0
    %731 = vmatpush1.msra.mxu0 0.0
    %732 = vmatprep.mubr.f32.mxu0 0.0
    %733 = vmatmul.mubr.f32.gmra.mrb[0].mxu0 %v419
    %v734 = vpop.f32.mrb[0].mxu0
    %v735 = vadd.f32 0.0, %v734
    %v736 = vpop.f32.mrb[0].mxu0
    %v737 = vadd.f32 0.0, %v736
    %738 = vmatprep.mubr.f32.mxu0 0.0
    %739 = vmatmul.mubr.f32.gmra.mrb[0].mxu0 %v420
    %v740 = vpop.f32.mrb[0].mxu0
    %v741 = vadd.f32 0.0, %v740
    %v742 = vpop.f32.mrb[0].mxu0
    %v743 = vadd.f32 0.0, %v742
    %744 = vmatprep.mubr.f32.mxu0 0.0
    %745 = vmatmul.mubr.f32.gmra.mrb[0].mxu0 %v421
    %v746 = vpop.f32.mrb[0].mxu0
    %v747 = vadd.f32 0.0, %v746
    %v748 = vpop.f32.mrb[0].mxu0
    %v749 = vadd.f32 0.0, %v748
    %750 = vmatprep.mubr.f32.mxu0 0.0
    %751 = vmatmul.mubr.f32.gmra.mrb[0].mxu0 %v422
    %v752 = vpop.f32.mrb[0].mxu0
    %v753 = vadd.f32 0.0, %v752
    %v754 = vpop.f32.mrb[0].mxu0
    %v755 = vadd.f32 0.0, %v754
    %756 = vmatprep.mubr.f32.mxu0 0.0
    %757 = vmatmul.mubr.f32.gmra.mrb[0].mxu0 %v423
    %v758 = vpop.f32.mrb[0].mxu0
    %v759 = vadd.f32 0.0, %v758
    %v760 = vpop.f32.mrb[0].mxu0
    %v761 = vadd.f32 0.0, %v760
    %762 = vmatprep.mubr.f32.mxu0 0.0
    %763 = vmatmul.mubr.f32.gmra.mrb[0].mxu0 %v424
    %v764 = vpop.f32.mrb[0].mxu0
    %v765 = vadd.f32 0.0, %v764
    %v766 = vpop.f32.mrb[0].mxu0
    %v767 = vadd.f32 0.0, %v766
    %768 = vmatprep.mubr.f32.mxu0 0.0
    %769 = vmatmul.mubr.f32.gmra.mrb[0].mxu0 %v425
    %v770 = vpop.f32.mrb[0].mxu0
    %v771 = vadd.f32 0.0, %v770
    %v772 = vpop.f32.mrb[0].mxu0
    %v773 = vadd.f32 0.0, %v772
    %774 = vmatprep.mubr.f32.mxu0 0.0
    %775 = vmatmul.mubr.f32.gmra.mrb[0].mxu0 %v426
    %v776 = vpop.f32.mrb[0].mxu0
    %v777 = vadd.f32 0.0, %v776
    %v778 = vpop.f32.mrb[0].mxu0
    %v779 = vadd.f32 0.0, %v778
    %780 = vdwg.mxu0
    %781 = vmatprep.subr.mxu0 %v428
    %782 = vmatpush1.msra.mxu0 %v427
    %783 = vmatprep.subr.mxu0 %v432
    %784 = vmatpush1.msra.mxu0 %v431
    %785 = vmatprep.subr.mxu0 %v436
    %786 = vmatpush1.msra.mxu0 %v435
    %787 = vmatprep.subr.mxu0 %v440
    %788 = vmatpush1.msra.mxu0 %v439
    %789 = vmatprep.subr.mxu0 %v444
    %790 = vmatpush1.msra.mxu0 %v443
    %791 = vmatprep.subr.mxu0 %v448
    %792 = vmatpush1.msra.mxu0 %v447
    %793 = vmatprep.subr.mxu0 %v452
    %794 = vmatpush1.msra.mxu0 %v451
    %795 = vmatprep.subr.mxu0 %v456
    %796 = vmatpush1.msra.mxu0 %v455
    %797 = vmatprep.subr.mxu0 %v460
    %798 = vmatpush1.msra.mxu0 %v459
    %799 = vmatprep.subr.mxu0 %v464
    %800 = vmatpush1.msra.mxu0 %v463
    %801 = vmatprep.subr.mxu0 %v468
    %802 = vmatpush1.msra.mxu0 %v467
    %803 = vmatprep.subr.mxu0 %v472
    %804 = vmatpush1.msra.mxu0 %v471
    %805 = vmatprep.subr.mxu0 %v476
    %806 = vmatpush1.msra.mxu0 %v475
    %807 = vmatprep.subr.mxu0 %v480
    %808 = vmatpush1.msra.mxu0 %v479
    %809 = vmatprep.subr.mxu0 %v484
    %810 = vmatpush1.msra.mxu0 %v483
    %811 = vmatprep.subr.mxu0 %v488
    %812 = vmatpush1.msra.mxu0 %v487
    %813 = vmatprep.subr.mxu0 0.0
    %814 = vmatpush1.msra.mxu0 0.0
    %815 = vmatprep.subr.mxu0 0.0
    %816 = vmatpush1.msra.mxu0 0.0
    %817 = vmatprep.subr.mxu0 0.0
    %818 = vmatpush1.msra.mxu0 0.0
    %819 = vmatprep.subr.mxu0 0.0
    %820 = vmatpush1.msra.mxu0 0.0
    %821 = vmatprep.subr.mxu0 0.0
    %822 = vmatpush1.msra.mxu0 0.0
    %823 = vmatprep.subr.mxu0 0.0
    %824 = vmatpush1.msra.mxu0 0.0
    %825 = vmatprep.subr.mxu0 0.0
    %826 = vmatpush1.msra.mxu0 0.0
    %827 = vmatprep.subr.mxu0 0.0
    %828 = vmatpush1.msra.mxu0 0.0
    %829 = vmatprep.subr.mxu0 0.0
    %830 = vmatpush1.msra.mxu0 0.0
    %831 = vmatprep.subr.mxu0 0.0
    %832 = vmatpush1.msra.mxu0 0.0
    %833 = vmatprep.subr.mxu0 0.0
    %834 = vmatpush1.msra.mxu0 0.0
    %835 = vmatprep.subr.mxu0 0.0
    %836 = vmatpush1.msra.mxu0 0.0
    %837 = vmatprep.subr.mxu0 0.0
    %838 = vmatpush1.msra.mxu0 0.0
    %839 = vmatprep.subr.mxu0 0.0
    %840 = vmatpush1.msra.mxu0 0.0
    %841 = vmatprep.subr.mxu0 0.0
    %842 = vmatpush1.msra.mxu0 0.0
    %843 = vmatprep.subr.mxu0 0.0
    %844 = vmatpush1.msra.mxu0 0.0
    %845 = vmatprep.mubr.f32.mxu0 0.0
    %846 = vmatmul.mubr.f32.gmra.mrb[0].mxu0 %v411
    %v847 = vpop.f32.mrb[0].mxu0
    %v848 = vadd.f32 %v622, %v847
    %v849 = vpop.f32.mrb[0].mxu0
    %v850 = vadd.f32 %v624, %v849
    %851 = vmatprep.mubr.f32.mxu0 0.0
    %852 = vmatmul.mubr.f32.gmra.mrb[0].mxu0 %v412
    %v853 = vpop.f32.mrb[0].mxu0
    %v854 = vadd.f32 %v628, %v853
    %v855 = vpop.f32.mrb[0].mxu0
    %v856 = vadd.f32 %v630, %v855
    %857 = vmatprep.mubr.f32.mxu0 0.0
    %858 = vmatmul.mubr.f32.gmra.mrb[0].mxu0 %v413
    %v859 = vpop.f32.mrb[0].mxu0
    %v860 = vadd.f32 %v634, %v859
    %v861 = vpop.f32.mrb[0].mxu0
    %v862 = vadd.f32 %v636, %v861
    %863 = vmatprep.mubr.f32.mxu0 0.0
    %864 = vmatmul.mubr.f32.gmra.mrb[0].mxu0 %v414
    %v865 = vpop.f32.mrb[0].mxu0
    %v866 = vadd.f32 %v640, %v865
    %v867 = vpop.f32.mrb[0].mxu0
    %v868 = vadd.f32 %v642, %v867
    %869 = vmatprep.mubr.f32.mxu0 0.0
    %870 = vmatmul.mubr.f32.gmra.mrb[0].mxu0 %v415
    %v871 = vpop.f32.mrb[0].mxu0
    %v872 = vadd.f32 %v646, %v871
    %v873 = vpop.f32.mrb[0].mxu0
    %v874 = vadd.f32 %v648, %v873
    %875 = vmatprep.mubr.f32.mxu0 0.0
    %876 = vmatmul.mubr.f32.gmra.mrb[0].mxu0 %v416
    %v877 = vpop.f32.mrb[0].mxu0
    %v878 = vadd.f32 %v652, %v877
    %v879 = vpop.f32.mrb[0].mxu0
    %v880 = vadd.f32 %v654, %v879
    %881 = vmatprep.mubr.f32.mxu0 0.0
    %882 = vmatmul.mubr.f32.gmra.mrb[0].mxu0 %v417
    %v883 = vpop.f32.mrb[0].mxu0
    %v884 = vadd.f32 %v658, %v883
    %v885 = vpop.f32.mrb[0].mxu0
    %v886 = vadd.f32 %v660, %v885
    %887 = vmatprep.mubr.f32.mxu0 0.0
    %888 = vmatmul.mubr.f32.gmra.mrb[0].mxu0 %v418
    %v889 = vpop.f32.mrb[0].mxu0
    %v890 = vadd.f32 %v664, %v889
    %v891 = vpop.f32.mrb[0].mxu0
    %v892 = vadd.f32 %v666, %v891
    %893 = vdwg.mxu0
    %894 = vmatprep.subr.mxu0 %v430
    %895 = vmatpush1.msra.mxu0 %v429
    %896 = vmatprep.subr.mxu0 %v434
    %897 = vmatpush1.msra.mxu0 %v433
    %898 = vmatprep.subr.mxu0 %v438
    %899 = vmatpush1.msra.mxu0 %v437
    %900 = vmatprep.subr.mxu0 %v442
    %901 = vmatpush1.msra.mxu0 %v441
    %902 = vmatprep.subr.mxu0 %v446
    %903 = vmatpush1.msra.mxu0 %v445
    %904 = vmatprep.subr.mxu0 %v450
    %905 = vmatpush1.msra.mxu0 %v449
    %906 = vmatprep.subr.mxu0 %v454
    %907 = vmatpush1.msra.mxu0 %v453
    %908 = vmatprep.subr.mxu0 %v458
    %909 = vmatpush1.msra.mxu0 %v457
    %910 = vmatprep.subr.mxu0 %v462
    %911 = vmatpush1.msra.mxu0 %v461
    %912 = vmatprep.subr.mxu0 %v466
    %913 = vmatpush1.msra.mxu0 %v465
    %914 = vmatprep.subr.mxu0 %v470
    %915 = vmatpush1.msra.mxu0 %v469
    %916 = vmatprep.subr.mxu0 %v474
    %917 = vmatpush1.msra.mxu0 %v473
    %918 = vmatprep.subr.mxu0 %v478
    %919 = vmatpush1.msra.mxu0 %v477
    %920 = vmatprep.subr.mxu0 %v482
    %921 = vmatpush1.msra.mxu0 %v481
    %922 = vmatprep.subr.mxu0 %v486
    %923 = vmatpush1.msra.mxu0 %v485
    %924 = vmatprep.subr.mxu0 %v490
    %925 = vmatpush1.msra.mxu0 %v489
    %926 = vmatprep.subr.mxu0 0.0
    %927 = vmatpush1.msra.mxu0 0.0
    %928 = vmatprep.subr.mxu0 0.0
    %929 = vmatpush1.msra.mxu0 0.0
    %930 = vmatprep.subr.mxu0 0.0
    %931 = vmatpush1.msra.mxu0 0.0
    %932 = vmatprep.subr.mxu0 0.0
    %933 = vmatpush1.msra.mxu0 0.0
    %934 = vmatprep.subr.mxu0 0.0
    %935 = vmatpush1.msra.mxu0 0.0
    %936 = vmatprep.subr.mxu0 0.0
    %937 = vmatpush1.msra.mxu0 0.0
    %938 = vmatprep.subr.mxu0 0.0
    %939 = vmatpush1.msra.mxu0 0.0
    %940 = vmatprep.subr.mxu0 0.0
    %941 = vmatpush1.msra.mxu0 0.0
    %942 = vmatprep.subr.mxu0 0.0
    %943 = vmatpush1.msra.mxu0 0.0
    %944 = vmatprep.subr.mxu0 0.0
    %945 = vmatpush1.msra.mxu0 0.0
    %946 = vmatprep.subr.mxu0 0.0
    %947 = vmatpush1.msra.mxu0 0.0
    %948 = vmatprep.subr.mxu0 0.0
    %949 = vmatpush1.msra.mxu0 0.0
    %950 = vmatprep.subr.mxu0 0.0
    %951 = vmatpush1.msra.mxu0 0.0
    %952 = vmatprep.subr.mxu0 0.0
    %953 = vmatpush1.msra.mxu0 0.0
    %954 = vmatprep.subr.mxu0 0.0
    %955 = vmatpush1.msra.mxu0 0.0
    %956 = vmatprep.subr.mxu0 0.0
    %957 = vmatpush1.msra.mxu0 0.0
    %958 = vmatprep.mubr.f32.mxu0 0.0
    %959 = vmatmul.mubr.f32.gmra.mrb[0].mxu0 %v411
    %v960 = vpop.f32.mrb[0].mxu0
    %v961 = vadd.f32 %v735, %v960
    %v962 = vpop.f32.mrb[0].mxu0
    %v963 = vadd.f32 %v737, %v962
    %964 = vmatprep.mubr.f32.mxu0 0.0
    %965 = vmatmul.mubr.f32.gmra.mrb[0].mxu0 %v412
    %v966 = vpop.f32.mrb[0].mxu0
    %v967 = vadd.f32 %v741, %v966
    %v968 = vpop.f32.mrb[0].mxu0
    %v969 = vadd.f32 %v743, %v968
    %970 = vmatprep.mubr.f32.mxu0 0.0
    %971 = vmatmul.mubr.f32.gmra.mrb[0].mxu0 %v413
    %v972 = vpop.f32.mrb[0].mxu0
    %v973 = vadd.f32 %v747, %v972
    %v974 = vpop.f32.mrb[0].mxu0
    %v975 = vadd.f32 %v749, %v974
    %976 = vmatprep.mubr.f32.mxu0 0.0
    %977 = vmatmul.mubr.f32.gmra.mrb[0].mxu0 %v414
    %v978 = vpop.f32.mrb[0].mxu0
    %v979 = vadd.f32 %v753, %v978
    %v980 = vpop.f32.mrb[0].mxu0
    %v981 = vadd.f32 %v755, %v980
    %982 = vmatprep.mubr.f32.mxu0 0.0
    %983 = vmatmul.mubr.f32.gmra.mrb[0].mxu0 %v415
    %v984 = vpop.f32.mrb[0].mxu0
    %v985 = vadd.f32 %v759, %v984
    %v986 = vpop.f32.mrb[0].mxu0
    %v987 = vadd.f32 %v761, %v986
    %988 = vmatprep.mubr.f32.mxu0 0.0
    %989 = vmatmul.mubr.f32.gmra.mrb[0].mxu0 %v416
    %v990 = vpop.f32.mrb[0].mxu0
    %v991 = vadd.f32 %v765, %v990
    %v992 = vpop.f32.mrb[0].mxu0
    %v993 = vadd.f32 %v767, %v992
    %994 = vmatprep.mubr.f32.mxu0 0.0
    %995 = vmatmul.mubr.f32.gmra.mrb[0].mxu0 %v417
    %v996 = vpop.f32.mrb[0].mxu0
    %v997 = vadd.f32 %v771, %v996
    %v998 = vpop.f32.mrb[0].mxu0
    %v999 = vadd.f32 %v773, %v998
    %1000 = vmatprep.mubr.f32.mxu0 0.0
    %1001 = vmatmul.mubr.f32.gmra.mrb[0].mxu0 %v418
    %v1002 = vpop.f32.mrb[0].mxu0
    %v1003 = vadd.f32 %v777, %v1002
    %v1004 = vpop.f32.mrb[0].mxu0
    %v1005 = vadd.f32 %v779, %v1004
    %1006 = vdwg.mxu0
    %v1007 = vld [vmem:[%s7] sm:$0xf]
    %v1009 = vlaneseq
    %v1010 = vshrl.u32 %v1009, 7
    %v1011 = vsub.s32 0, %v1010
    %v1012 = vrot.slane %v1007, %v1011
    %v1013 = vlaneseq
    %v1014 = vshrl.u32 %v1013, 7
    %v1015 = vsub.s32 1, %v1014
    %v1016 = vrot.slane %v1007, %v1015
    %v1017 = vlaneseq
    %v1018 = vshrl.u32 %v1017, 7
    %v1019 = vsub.s32 2, %v1018
    %v1020 = vrot.slane %v1007, %v1019
    %v1021 = vlaneseq
    %v1022 = vshrl.u32 %v1021, 7
    %v1023 = vsub.s32 3, %v1022
    %v1024 = vrot.slane %v1007, %v1023
    %v1029 = vadd.f32 %v848, %v1012
    %v1030 = vadd.f32 %v850, %v1016
    %v1031 = vadd.f32 %v961, %v1020
    %v1032 = vadd.f32 %v963, %v1024
    %v1033 = vadd.f32 %v854, %v1012
    %v1034 = vadd.f32 %v856, %v1016
    %v1035 = vadd.f32 %v967, %v1020
    %v1036 = vadd.f32 %v969, %v1024
    %v1037 = vadd.f32 %v860, %v1012
    %v1038 = vadd.f32 %v862, %v1016
    %v1039 = vadd.f32 %v973, %v1020
    %v1040 = vadd.f32 %v975, %v1024
    %v1041 = vadd.f32 %v866, %v1012
    %v1042 = vadd.f32 %v868, %v1016
    %v1043 = vadd.f32 %v979, %v1020
    %v1044 = vadd.f32 %v981, %v1024
    %v1045 = vadd.f32 %v872, %v1012
    %v1046 = vadd.f32 %v874, %v1016
    %v1047 = vadd.f32 %v985, %v1020
    %v1048 = vadd.f32 %v987, %v1024
    %v1049 = vadd.f32 %v878, %v1012
    %v1050 = vadd.f32 %v880, %v1016
    %v1051 = vadd.f32 %v991, %v1020
    %v1052 = vadd.f32 %v993, %v1024
    %v1053 = vadd.f32 %v884, %v1012
    %v1054 = vadd.f32 %v886, %v1016
    %v1055 = vadd.f32 %v997, %v1020
    %v1056 = vadd.f32 %v999, %v1024
    %v1057 = vadd.f32 %v890, %v1012
    %v1058 = vadd.f32 %v892, %v1016
    %v1059 = vadd.f32 %v1003, %v1020
    %v1060 = vadd.f32 %v1005, %v1024
    %v1061 = vxor.u32 %v1029, 2147483648
    %v1062 = vxor.u32 %v1033, 2147483648
    %v1063 = vxor.u32 %v1037, 2147483648
    %v1064 = vxor.u32 %v1041, 2147483648
    %v1065 = vxor.u32 %v1045, 2147483648
    %v1066 = vxor.u32 %v1049, 2147483648
    %v1067 = vxor.u32 %v1053, 2147483648
    %v1068 = vxor.u32 %v1057, 2147483648
    %v1069 = vmul.f32 %v1061, 1.442695
    %v1070 = vpow.pop %v1069
    %v1071 = vmul.f32 %v1062, 1.442695
    %v1072 = vpow.pop %v1071
    %v1073 = vmul.f32 %v1063, 1.442695
    %v1074 = vpow.pop %v1073
    %v1075 = vmul.f32 %v1064, 1.442695
    %v1076 = vpow.pop %v1075
    %v1077 = vmul.f32 %v1065, 1.442695
    %v1078 = vpow.pop %v1077
    %v1079 = vmul.f32 %v1066, 1.442695
    %v1080 = vpow.pop %v1079
    %v1081 = vmul.f32 %v1067, 1.442695
    %v1082 = vpow.pop %v1081
    %v1083 = vmul.f32 %v1068, 1.442695
    %v1084 = vpow.pop %v1083
    %v1085 = vadd.f32 %v1070, 1.0
    %v1086 = vadd.f32 %v1072, 1.0
    %v1087 = vadd.f32 %v1074, 1.0
    %v1088 = vadd.f32 %v1076, 1.0
    %v1089 = vadd.f32 %v1078, 1.0
    %v1090 = vadd.f32 %v1080, 1.0
    %v1091 = vadd.f32 %v1082, 1.0
    %v1092 = vadd.f32 %v1084, 1.0
    %v1093 = vrcp.pop %v1085
    %v1094 = vmul.f32 1.0, %v1093
    %v1095 = vrcp.pop %v1086
    %v1096 = vmul.f32 1.0, %v1095
    %v1097 = vrcp.pop %v1087
    %v1098 = vmul.f32 1.0, %v1097
    %v1099 = vrcp.pop %v1088
    %v1100 = vmul.f32 1.0, %v1099
    %v1101 = vrcp.pop %v1089
    %v1102 = vmul.f32 1.0, %v1101
    %v1103 = vrcp.pop %v1090
    %v1104 = vmul.f32 1.0, %v1103
    %v1105 = vrcp.pop %v1091
    %v1106 = vmul.f32 1.0, %v1105
    %v1107 = vrcp.pop %v1092
    %v1108 = vmul.f32 1.0, %v1107
    %v1109 = vxor.u32 %v1030, 2147483648
    %v1110 = vxor.u32 %v1034, 2147483648
    %v1111 = vxor.u32 %v1038, 2147483648
    %v1112 = vxor.u32 %v1042, 2147483648
    %v1113 = vxor.u32 %v1046, 2147483648
    %v1114 = vxor.u32 %v1050, 2147483648
    %v1115 = vxor.u32 %v1054, 2147483648
    %v1116 = vxor.u32 %v1058, 2147483648
    %v1117 = vmul.f32 %v1109, 1.442695
    %v1118 = vpow.pop %v1117
    %v1119 = vmul.f32 %v1110, 1.442695
    %v1120 = vpow.pop %v1119
    %v1121 = vmul.f32 %v1111, 1.442695
    %v1122 = vpow.pop %v1121
    %v1123 = vmul.f32 %v1112, 1.442695
    %v1124 = vpow.pop %v1123
    %v1125 = vmul.f32 %v1113, 1.442695
    %v1126 = vpow.pop %v1125
    %v1127 = vmul.f32 %v1114, 1.442695
    %v1128 = vpow.pop %v1127
    %v1129 = vmul.f32 %v1115, 1.442695
    %v1130 = vpow.pop %v1129
    %v1131 = vmul.f32 %v1116, 1.442695
    %v1132 = vpow.pop %v1131
    %v1133 = vadd.f32 %v1118, 1.0
    %v1134 = vadd.f32 %v1120, 1.0
    %v1135 = vadd.f32 %v1122, 1.0
    %v1136 = vadd.f32 %v1124, 1.0
    %v1137 = vadd.f32 %v1126, 1.0
    %v1138 = vadd.f32 %v1128, 1.0
    %v1139 = vadd.f32 %v1130, 1.0
    %v1140 = vadd.f32 %v1132, 1.0
    %v1141 = vrcp.pop %v1133
    %v1142 = vmul.f32 1.0, %v1141
    %v1143 = vrcp.pop %v1134
    %v1144 = vmul.f32 1.0, %v1143
    %v1145 = vrcp.pop %v1135
    %v1146 = vmul.f32 1.0, %v1145
    %v1147 = vrcp.pop %v1136
    %v1148 = vmul.f32 1.0, %v1147
    %v1149 = vrcp.pop %v1137
    %v1150 = vmul.f32 1.0, %v1149
    %v1151 = vrcp.pop %v1138
    %v1152 = vmul.f32 1.0, %v1151
    %v1153 = vrcp.pop %v1139
    %v1154 = vmul.f32 1.0, %v1153
    %v1155 = vrcp.pop %v1140
    %v1156 = vmul.f32 1.0, %v1155
    %v1157 = vmul.f32 %v1094, %v1032
    %v1158 = vmul.f32 %v1096, %v1036
    %v1159 = vmul.f32 %v1098, %v1040
    %v1160 = vmul.f32 %v1100, %v1044
    %v1161 = vmul.f32 %v1102, %v1048
    %v1162 = vmul.f32 %v1104, %v1052
    %v1163 = vmul.f32 %v1106, %v1056
    %v1164 = vmul.f32 %v1108, %v1060
    %v1165 = vadd.f32 %v1031, %v1157
    %v1166 = vadd.f32 %v1035, %v1158
    %v1167 = vadd.f32 %v1039, %v1159
    %v1168 = vadd.f32 %v1043, %v1160
    %v1169 = vadd.f32 %v1047, %v1161
    %v1170 = vadd.f32 %v1051, %v1162
    %v1171 = vadd.f32 %v1055, %v1163
    %v1172 = vadd.f32 %v1059, %v1164
    %v1173 = vtanh.pop %v1165
    %v1174 = vtanh.pop %v1166
    %v1175 = vtanh.pop %v1167
    %v1176 = vtanh.pop %v1168
    %v1177 = vtanh.pop %v1169
    %v1178 = vtanh.pop %v1170
    %v1179 = vtanh.pop %v1171
    %v1180 = vtanh.pop %v1172
    %v1181 = vsub.f32 1.0, %v1142
    %v1182 = vsub.f32 1.0, %v1144
    %v1183 = vsub.f32 1.0, %v1146
    %v1184 = vsub.f32 1.0, %v1148
    %v1185 = vsub.f32 1.0, %v1150
    %v1186 = vsub.f32 1.0, %v1152
    %v1187 = vsub.f32 1.0, %v1154
    %v1188 = vsub.f32 1.0, %v1156
    %v1189 = vmul.f32 %v1181, %v1173
    %v1190 = vmul.f32 %v1182, %v1174
    %v1191 = vmul.f32 %v1183, %v1175
    %v1192 = vmul.f32 %v1184, %v1176
    %v1193 = vmul.f32 %v1185, %v1177
    %v1194 = vmul.f32 %v1186, %v1178
    %v1195 = vmul.f32 %v1187, %v1179
    %v1196 = vmul.f32 %v1188, %v1180
    %v1197 = vmul.f32 %v1142, %v419
    %v1198 = vmul.f32 %v1144, %v420
    %v1199 = vmul.f32 %v1146, %v421
    %v1200 = vmul.f32 %v1148, %v422
    %v1201 = vmul.f32 %v1150, %v423
    %v1202 = vmul.f32 %v1152, %v424
    %v1203 = vmul.f32 %v1154, %v425
    %v1204 = vmul.f32 %v1156, %v426
    %v1205 = vadd.f32 %v1189, %v1197
    %v1206 = vadd.f32 %v1190, %v1198
    %v1207 = vadd.f32 %v1191, %v1199
    %v1208 = vadd.f32 %v1192, %v1200
    %v1209 = vadd.f32 %v1193, %v1201
    %v1210 = vadd.f32 %v1194, %v1202
    %v1211 = vadd.f32 %v1195, %v1203
    %v1212 = vadd.f32 %v1196, %v1204
    %1213 = vst [vmem:[#allocation16] sm:$0xff] %v1205
    %1214 = vst [vmem:[#allocation16 + $0x8] sm:$0xff] %v1206
    %1215 = vst [vmem:[#allocation16 + $0x10] sm:$0xff] %v1207
    %1216 = vst [vmem:[#allocation16 + $0x18] sm:$0xff] %v1208
    %1217 = vst [vmem:[#allocation16 + $0x20] sm:$0xff] %v1209
    %1218 = vst [vmem:[#allocation16 + $0x28] sm:$0xff] %v1210
    %1219 = vst [vmem:[#allocation16 + $0x30] sm:$0xff] %v1211
    %1220 = vst [vmem:[#allocation16 + $0x38] sm:$0xff] %v1212
    %v1221 = vld [vmem:[#allocation13] sm:$0xff]
    %v1222 = vld [vmem:[#allocation13 + $0x8] sm:$0xff]
    %v1223 = vld [vmem:[#allocation13 + $0x10] sm:$0xff]
    %v1224 = vld [vmem:[#allocation13 + $0x18] sm:$0xff]
    %v1225 = vld [vmem:[#allocation13 + $0x20] sm:$0xff]
    %v1226 = vld [vmem:[#allocation13 + $0x28] sm:$0xff]
    %v1227 = vld [vmem:[#allocation13 + $0x30] sm:$0xff]
    %v1228 = vld [vmem:[#allocation13 + $0x38] sm:$0xff]
    %v1229 = vld [vmem:[#allocation13 + $0x40] sm:$0xff]
    %v1230 = vld [vmem:[#allocation13 + $0x48] sm:$0xff]
    %v1231 = vld [vmem:[#allocation13 + $0x50] sm:$0xff]
    %v1232 = vld [vmem:[#allocation13 + $0x58] sm:$0xff]
    %v1233 = vld [vmem:[#allocation13 + $0x60] sm:$0xff]
    %v1234 = vld [vmem:[#allocation13 + $0x68] sm:$0xff]
    %v1235 = vld [vmem:[#allocation13 + $0x70] sm:$0xff]
    %v1236 = vld [vmem:[#allocation13 + $0x78] sm:$0xff]
    %v1237 = vld [vmem:[%s9] sm:$0x1]
    %v1239 = vlaneseq
    %v1240 = vshrl.u32 %v1239, 7
    %v1241 = vsub.s32 0, %v1240
    %v1242 = vrot.slane %v1237, %v1241
    %1244 = vmatprep.subr.mxu0 0.0
    %1245 = vmatpush1.msra.mxu0 %v1221
    %1246 = vmatprep.subr.mxu0 0.0
    %1247 = vmatpush1.msra.mxu0 %v1222
    %1248 = vmatprep.subr.mxu0 0.0
    %1249 = vmatpush1.msra.mxu0 %v1223
    %1250 = vmatprep.subr.mxu0 0.0
    %1251 = vmatpush1.msra.mxu0 %v1224
    %1252 = vmatprep.subr.mxu0 0.0
    %1253 = vmatpush1.msra.mxu0 %v1225
    %1254 = vmatprep.subr.mxu0 0.0
    %1255 = vmatpush1.msra.mxu0 %v1226
    %1256 = vmatprep.subr.mxu0 0.0
    %1257 = vmatpush1.msra.mxu0 %v1227
    %1258 = vmatprep.subr.mxu0 0.0
    %1259 = vmatpush1.msra.mxu0 %v1228
    %1260 = vmatprep.subr.mxu0 0.0
    %1261 = vmatpush1.msra.mxu0 %v1229
    %1262 = vmatprep.subr.mxu0 0.0
    %1263 = vmatpush1.msra.mxu0 %v1230
    %1264 = vmatprep.subr.mxu0 0.0
    %1265 = vmatpush1.msra.mxu0 %v1231
    %1266 = vmatprep.subr.mxu0 0.0
    %1267 = vmatpush1.msra.mxu0 %v1232
    %1268 = vmatprep.subr.mxu0 0.0
    %1269 = vmatpush1.msra.mxu0 %v1233
    %1270 = vmatprep.subr.mxu0 0.0
    %1271 = vmatpush1.msra.mxu0 %v1234
    %1272 = vmatprep.subr.mxu0 0.0
    %1273 = vmatpush1.msra.mxu0 %v1235
    %1274 = vmatprep.subr.mxu0 0.0
    %1275 = vmatpush1.msra.mxu0 %v1236
    %1276 = vmatprep.subr.mxu0 0.0
    %1277 = vmatpush1.msra.mxu0 0.0
    %1278 = vmatprep.subr.mxu0 0.0
    %1279 = vmatpush1.msra.mxu0 0.0
    %1280 = vmatprep.subr.mxu0 0.0
    %1281 = vmatpush1.msra.mxu0 0.0
    %1282 = vmatprep.subr.mxu0 0.0
    %1283 = vmatpush1.msra.mxu0 0.0
    %1284 = vmatprep.subr.mxu0 0.0
    %1285 = vmatpush1.msra.mxu0 0.0
    %1286 = vmatprep.subr.mxu0 0.0
    %1287 = vmatpush1.msra.mxu0 0.0
    %1288 = vmatprep.subr.mxu0 0.0
    %1289 = vmatpush1.msra.mxu0 0.0
    %1290 = vmatprep.subr.mxu0 0.0
    %1291 = vmatpush1.msra.mxu0 0.0
    %1292 = vmatprep.subr.mxu0 0.0
    %1293 = vmatpush1.msra.mxu0 0.0
    %1294 = vmatprep.subr.mxu0 0.0
    %1295 = vmatpush1.msra.mxu0 0.0
    %1296 = vmatprep.subr.mxu0 0.0
    %1297 = vmatpush1.msra.mxu0 0.0
    %1298 = vmatprep.subr.mxu0 0.0
    %1299 = vmatpush1.msra.mxu0 0.0
    %1300 = vmatprep.subr.mxu0 0.0
    %1301 = vmatpush1.msra.mxu0 0.0
    %1302 = vmatprep.subr.mxu0 0.0
    %1303 = vmatpush1.msra.mxu0 0.0
    %1304 = vmatprep.subr.mxu0 0.0
    %1305 = vmatpush1.msra.mxu0 0.0
    %1306 = vmatprep.subr.mxu0 0.0
    %1307 = vmatpush1.msra.mxu0 0.0
    %1308 = vmatprep.mubr.f32.mxu0 0.0
    %1309 = vmatmul.mubr.f32.gmra.mrb[0].mxu0 %v1205
    %v1310 = vpop.f32.mrb[0].mxu0
    %v1311 = vadd.f32 %v1242, %v1310
    %v1312 = vpop.f32.mrb[0].mxu0
    %1313 = vmatprep.mubr.f32.mxu0 0.0
    %1314 = vmatmul.mubr.f32.gmra.mrb[0].mxu0 %v1206
    %v1315 = vpop.f32.mrb[0].mxu0
    %v1316 = vadd.f32 %v1242, %v1315
    %v1317 = vpop.f32.mrb[0].mxu0
    %1318 = vmatprep.mubr.f32.mxu0 0.0
    %1319 = vmatmul.mubr.f32.gmra.mrb[0].mxu0 %v1207
    %v1320 = vpop.f32.mrb[0].mxu0
    %v1321 = vadd.f32 %v1242, %v1320
    %v1322 = vpop.f32.mrb[0].mxu0
    %1323 = vmatprep.mubr.f32.mxu0 0.0
    %1324 = vmatmul.mubr.f32.gmra.mrb[0].mxu0 %v1208
    %v1325 = vpop.f32.mrb[0].mxu0
    %v1326 = vadd.f32 %v1242, %v1325
    %v1327 = vpop.f32.mrb[0].mxu0
    %1328 = vmatprep.mubr.f32.mxu0 0.0
    %1329 = vmatmul.mubr.f32.gmra.mrb[0].mxu0 %v1209
    %v1330 = vpop.f32.mrb[0].mxu0
    %v1331 = vadd.f32 %v1242, %v1330
    %v1332 = vpop.f32.mrb[0].mxu0
    %1333 = vmatprep.mubr.f32.mxu0 0.0
    %1334 = vmatmul.mubr.f32.gmra.mrb[0].mxu0 %v1210
    %v1335 = vpop.f32.mrb[0].mxu0
    %v1336 = vadd.f32 %v1242, %v1335
    %v1337 = vpop.f32.mrb[0].mxu0
    %1338 = vmatprep.mubr.f32.mxu0 0.0
    %1339 = vmatmul.mubr.f32.gmra.mrb[0].mxu0 %v1211
    %v1340 = vpop.f32.mrb[0].mxu0
    %v1341 = vadd.f32 %v1242, %v1340
    %v1342 = vpop.f32.mrb[0].mxu0
    %1343 = vmatprep.mubr.f32.mxu0 0.0
    %1344 = vmatmul.mubr.f32.gmra.mrb[0].mxu0 %v1212
    %v1345 = vpop.f32.mrb[0].mxu0
    %v1346 = vadd.f32 %v1242, %v1345
    %v1347 = vpop.f32.mrb[0].mxu0
    %1348 = vdwg.mxu0
    %v1349 = vmax.f32 %v1311, 0.0
    %v1350 = vmax.f32 %v1316, 0.0
    %v1351 = vmax.f32 %v1321, 0.0
    %v1352 = vmax.f32 %v1326, 0.0
    %v1353 = vmax.f32 %v1331, 0.0
    %v1354 = vmax.f32 %v1336, 0.0
    %v1355 = vmax.f32 %v1341, 0.0
    %v1356 = vmax.f32 %v1346, 0.0
    %v1357 = vld [vmem:[#allocation14] sm:$0xff]
    %v1358 = vld [vmem:[#allocation14 + $0x8] sm:$0xff]
    %v1359 = vld [vmem:[#allocation14 + $0x10] sm:$0xff]
    %v1360 = vld [vmem:[#allocation14 + $0x18] sm:$0xff]
    %v1361 = vld [vmem:[#allocation14 + $0x20] sm:$0xff]
    %v1362 = vld [vmem:[#allocation14 + $0x28] sm:$0xff]
    %v1363 = vld [vmem:[#allocation14 + $0x30] sm:$0xff]
    %v1364 = vld [vmem:[#allocation14 + $0x38] sm:$0xff]
    %v1365 = vld [vmem:[#allocation14 + $0x40] sm:$0xff]
    %v1366 = vld [vmem:[#allocation14 + $0x48] sm:$0xff]
    %v1367 = vld [vmem:[#allocation14 + $0x50] sm:$0xff]
    %v1368 = vld [vmem:[#allocation14 + $0x58] sm:$0xff]
    %v1369 = vld [vmem:[#allocation14 + $0x60] sm:$0xff]
    %v1370 = vld [vmem:[#allocation14 + $0x68] sm:$0xff]
    %v1371 = vld [vmem:[#allocation14 + $0x70] sm:$0xff]
    %v1372 = vld [vmem:[#allocation14 + $0x78] sm:$0xff]
    %v1373 = vld [vmem:[%s11] sm:$0x1]
    %v1375 = vlaneseq
    %v1376 = vshrl.u32 %v1375, 7
    %v1377 = vsub.s32 0, %v1376
    %v1378 = vrot.slane %v1373, %v1377
    %1380 = vmatprep.subr.mxu0 0.0
    %1381 = vmatpush1.msra.mxu0 %v1357
    %1382 = vmatprep.subr.mxu0 0.0
    %1383 = vmatpush1.msra.mxu0 %v1358
    %1384 = vmatprep.subr.mxu0 0.0
    %1385 = vmatpush1.msra.mxu0 %v1359
    %1386 = vmatprep.subr.mxu0 0.0
    %1387 = vmatpush1.msra.mxu0 %v1360
    %1388 = vmatprep.subr.mxu0 0.0
    %1389 = vmatpush1.msra.mxu0 %v1361
    %1390 = vmatprep.subr.mxu0 0.0
    %1391 = vmatpush1.msra.mxu0 %v1362
    %1392 = vmatprep.subr.mxu0 0.0
    %1393 = vmatpush1.msra.mxu0 %v1363
    %1394 = vmatprep.subr.mxu0 0.0
    %1395 = vmatpush1.msra.mxu0 %v1364
    %1396 = vmatprep.subr.mxu0 0.0
    %1397 = vmatpush1.msra.mxu0 %v1365
    %1398 = vmatprep.subr.mxu0 0.0
    %1399 = vmatpush1.msra.mxu0 %v1366
    %1400 = vmatprep.subr.mxu0 0.0
    %1401 = vmatpush1.msra.mxu0 %v1367
    %1402 = vmatprep.subr.mxu0 0.0
    %1403 = vmatpush1.msra.mxu0 %v1368
    %1404 = vmatprep.subr.mxu0 0.0
    %1405 = vmatpush1.msra.mxu0 %v1369
    %1406 = vmatprep.subr.mxu0 0.0
    %1407 = vmatpush1.msra.mxu0 %v1370
    %1408 = vmatprep.subr.mxu0 0.0
    %1409 = vmatpush1.msra.mxu0 %v1371
    %1410 = vmatprep.subr.mxu0 0.0
    %1411 = vmatpush1.msra.mxu0 %v1372
    %1412 = vmatprep.subr.mxu0 0.0
    %1413 = vmatpush1.msra.mxu0 0.0
    %1414 = vmatprep.subr.mxu0 0.0
    %1415 = vmatpush1.msra.mxu0 0.0
    %1416 = vmatprep.subr.mxu0 0.0
    %1417 = vmatpush1.msra.mxu0 0.0
    %1418 = vmatprep.subr.mxu0 0.0
    %1419 = vmatpush1.msra.mxu0 0.0
    %1420 = vmatprep.subr.mxu0 0.0
    %1421 = vmatpush1.msra.mxu0 0.0
    %1422 = vmatprep.subr.mxu0 0.0
    %1423 = vmatpush1.msra.mxu0 0.0
    %1424 = vmatprep.subr.mxu0 0.0
    %1425 = vmatpush1.msra.mxu0 0.0
    %1426 = vmatprep.subr.mxu0 0.0
    %1427 = vmatpush1.msra.mxu0 0.0
    %1428 = vmatprep.subr.mxu0 0.0
    %1429 = vmatpush1.msra.mxu0 0.0
    %1430 = vmatprep.subr.mxu0 0.0
    %1431 = vmatpush1.msra.mxu0 0.0
    %1432 = vmatprep.subr.mxu0 0.0
    %1433 = vmatpush1.msra.mxu0 0.0
    %1434 = vmatprep.subr.mxu0 0.0
    %1435 = vmatpush1.msra.mxu0 0.0
    %1436 = vmatprep.subr.mxu0 0.0
    %1437 = vmatpush1.msra.mxu0 0.0
    %1438 = vmatprep.subr.mxu0 0.0
    %1439 = vmatpush1.msra.mxu0 0.0
    %1440 = vmatprep.subr.mxu0 0.0
    %1441 = vmatpush1.msra.mxu0 0.0
    %1442 = vmatprep.subr.mxu0 0.0
    %1443 = vmatpush1.msra.mxu0 0.0
    %1444 = vmatprep.mubr.f32.mxu0 0.0
    %1445 = vmatmul.mubr.f32.gmra.mrb[0].mxu0 %v1349
    %v1446 = vpop.f32.mrb[0].mxu0
    %v1447 = vadd.f32 %v1378, %v1446
    %v1448 = vpop.f32.mrb[0].mxu0
    %1449 = vmatprep.mubr.f32.mxu0 0.0
    %1450 = vmatmul.mubr.f32.gmra.mrb[0].mxu0 %v1350
    %v1451 = vpop.f32.mrb[0].mxu0
    %v1452 = vadd.f32 %v1378, %v1451
    %v1453 = vpop.f32.mrb[0].mxu0
    %1454 = vmatprep.mubr.f32.mxu0 0.0
    %1455 = vmatmul.mubr.f32.gmra.mrb[0].mxu0 %v1351
    %v1456 = vpop.f32.mrb[0].mxu0
    %v1457 = vadd.f32 %v1378, %v1456
    %v1458 = vpop.f32.mrb[0].mxu0
    %1459 = vmatprep.mubr.f32.mxu0 0.0
    %1460 = vmatmul.mubr.f32.gmra.mrb[0].mxu0 %v1352
    %v1461 = vpop.f32.mrb[0].mxu0
    %v1462 = vadd.f32 %v1378, %v1461
    %v1463 = vpop.f32.mrb[0].mxu0
    %1464 = vmatprep.mubr.f32.mxu0 0.0
    %1465 = vmatmul.mubr.f32.gmra.mrb[0].mxu0 %v1353
    %v1466 = vpop.f32.mrb[0].mxu0
    %v1467 = vadd.f32 %v1378, %v1466
    %v1468 = vpop.f32.mrb[0].mxu0
    %1469 = vmatprep.mubr.f32.mxu0 0.0
    %1470 = vmatmul.mubr.f32.gmra.mrb[0].mxu0 %v1354
    %v1471 = vpop.f32.mrb[0].mxu0
    %v1472 = vadd.f32 %v1378, %v1471
    %v1473 = vpop.f32.mrb[0].mxu0
    %1474 = vmatprep.mubr.f32.mxu0 0.0
    %1475 = vmatmul.mubr.f32.gmra.mrb[0].mxu0 %v1355
    %v1476 = vpop.f32.mrb[0].mxu0
    %v1477 = vadd.f32 %v1378, %v1476
    %v1478 = vpop.f32.mrb[0].mxu0
    %1479 = vmatprep.mubr.f32.mxu0 0.0
    %1480 = vmatmul.mubr.f32.gmra.mrb[0].mxu0 %v1356
    %v1481 = vpop.f32.mrb[0].mxu0
    %v1482 = vadd.f32 %v1378, %v1481
    %v1483 = vpop.f32.mrb[0].mxu0
    %1484 = vdwg.mxu0
    %1485 = vst [vmem:[#allocation17] sm:$0xff] %v1447
    %1486 = vst [vmem:[#allocation17 + $0x8] sm:$0xff] %v1452
    %1487 = vst [vmem:[#allocation17 + $0x10] sm:$0xff] %v1457
    %1488 = vst [vmem:[#allocation17 + $0x18] sm:$0xff] %v1462
    %1489 = vst [vmem:[#allocation17 + $0x20] sm:$0xff] %v1467
    %1490 = vst [vmem:[#allocation17 + $0x28] sm:$0xff] %v1472
    %1491 = vst [vmem:[#allocation17 + $0x30] sm:$0xff] %v1477
    %1492 = vst [vmem:[#allocation17 + $0x38] sm:$0xff] %v1482
    // Predicated region
    $region82: #{tpu_custom_call.1} parent=1 // pred_check
      _
    $region83: #{tpu_custom_call.1} parent=1 // pred_check_branch
      %1494 = sbr.rel (0) target = $region85
    $region84: #{tpu_custom_call.1} parent=1 // pred_region
      %s1496 = ssub.s32 1024, 1024
      %1497 = vsyncadd [#allocation4], %s1496
      %s1498 = sshll.u32 [#allocation16], 4
      %s1499 = int_to_ptr.vmem [resolvable:$true] %s1498
      %1504 = dma.vmem_to_hbm [thread:$0]  %s1499, 1024, %s12, [#allocation4], 128, 128, 8
    $region85: #{tpu_custom_call.1} parent=1 // pred_fallthru
      _
    // Predicated region
    $region86: #{tpu_custom_call.1} parent=1 // pred_check
      _
    $region87: #{tpu_custom_call.1} parent=1 // pred_check_branch
      %1506 = sbr.rel (0) target = $region89
    $region88: #{tpu_custom_call.1} parent=1 // pred_region
      %s1508 = ssub.s32 1024, 1024
      %1509 = vsyncadd [#allocation18], %s1508
      %s1510 = sshll.u32 [#allocation17], 4
      %s1511 = int_to_ptr.vmem [resolvable:$true] %s1510
      %1516 = dma.vmem_to_hbm [thread:$0]  %s1511, 1024, %s13, [#allocation18], 128, 128, 8
    $region89: #{tpu_custom_call.1} parent=1 // pred_fallthru
      _
    // Predicated region
    $region90: #{tpu_custom_call.1} parent=1 // pred_check
      _
    $region91: #{tpu_custom_call.1} parent=1 // pred_check_branch
      %1518 = sbr.rel (0) target = $region93
    $region92: #{tpu_custom_call.1} parent=1 // pred_region
      %1519 = dma.done [#allocation4], 1024
    $region93: #{tpu_custom_call.1} parent=1 // pred_fallthru
      _
    // Predicated region
    $region94: #{tpu_custom_call.1} parent=1 // pred_check
      _
    $region95: #{tpu_custom_call.1} parent=1 // pred_check_branch
      %1521 = sbr.rel (0) target = $region97
    $region96: #{tpu_custom_call.1} parent=1 // pred_region
      %1522 = dma.done [#allocation18], 1024
    $region97: #{tpu_custom_call.1} parent=1 // pred_fallthru
      _
    %1523 = vsyncpa [#allocation3], 1
    %1524 = vsyncpa [#allocation6], 1
    %1525 = vsyncpa [#allocation9], 1
    %1526 = vsyncpa [#allocation12], 1
    %1527 = vsyncpa [#allocation15], 1
    %1528 = vsyncpa [#allocation4], 1
    %1529 = vsyncpa [#allocation18], 1

</llo_original>
